<compile_context>
chip_gen: v7x
topology: tpu7x:2x2x1
jax: 0.10.0
libtpu: 0.0.40
codegen_flags: <defaults>
</compile_context>

<pallas_src>
import functools

import jax
import jax.numpy as jnp
from jax.experimental import pallas as pl
from jax.experimental.pallas import tpu as pltpu


K_TILE = 256                     # reduction (column) tile of A_hat / row tile of H
_RESIDENT_H_MAX_BYTES = 8 << 20  # keep H fully VMEM-resident below this size


def _round_up(v, m):
    return ((v + m - 1) // m) * m


def padded_num_nodes(n, k_tile=K_TILE):
    """Padded node count the kernel will use (lets callers pre-pad A_hat)."""
    return _round_up(n, k_tile)


# --------------------------------------------------------------------------- phase 1
def _xw_kernel(x_ref, w_ref, h_ref):
    # H = X @ W, bf16 inputs, f32 accumulation, bf16 output (computed once).
    h_ref[...] = jnp.dot(
        x_ref[...], w_ref[...], preferred_element_type=jnp.float32
    ).astype(h_ref.dtype)


# --------------------------------------------------------------------------- phase 2
def _make_agg_kernel(k_tile, resident_h, residual):
    """out = relu(A_hat @ H + b) (+ x_res), accumulated over the k grid axis."""

    def body(a_ref, h_ref, b_ref, xres_ref, o_ref, acc_ref):
        k = pl.program_id(1)

        @pl.when(k == 0)
        def _():
            acc_ref[...] = jnp.zeros_like(acc_ref)

        if resident_h:
            # H lives fully in VMEM (constant index_map); slice the k-chunk locally.
            off = pl.multiple_of(k * k_tile, k_tile)
            h_blk = h_ref[pl.ds(off, k_tile), :]
        else:
            h_blk = h_ref[...]

        acc_ref[...] += jnp.dot(a_ref[...], h_blk,
                                preferred_element_type=jnp.float32)

        @pl.when(k == pl.num_programs(1) - 1)
        def _():
            out = jnp.maximum(acc_ref[...] + b_ref[...], 0.0)   # bias + ReLU
            if residual:
                out = out + xres_ref[...]                        # residual (f32)
            o_ref[...] = out.astype(o_ref.dtype)

    if residual:
        def kernel(a_ref, h_ref, b_ref, xres_ref, o_ref, acc_ref):
            body(a_ref, h_ref, b_ref, xres_ref, o_ref, acc_ref)
    else:
        def kernel(a_ref, h_ref, b_ref, o_ref, acc_ref):
            body(a_ref, h_ref, b_ref, None, o_ref, acc_ref)
    return kernel


@functools.partial(jax.jit, static_argnames=("residual", "k_tile"))
def gcn_conv_layer(x, a_hat, w, b, *, residual=True, k_tile=K_TILE):
    """Pallas GCNConvLayer forward.

    x:     [N, dim_in]           float32 node features
    a_hat: [N, N] f32  OR  [padded_num_nodes(N), padded_num_nodes(N)] bf16
           symmetric-normalized adjacency (with self loops); the padded bf16
           form is used as-is (no extra O(N^2) pad/cast pass).
    w:     [dim_in, dim_out]     (transposed PyG Linear weight)
    b:     [1, dim_out]
    """
    n, dim_in = x.shape
    dim_out = w.shape[1]
    if residual and dim_in != dim_out:
        raise ValueError("residual connection requires dim_in == dim_out")

    # Lane-dense / MXU-aligned padding.
    din_p = _round_up(dim_in, 128)
    dout_p = _round_up(dim_out, 128)
    n_pad = _round_up(n, k_tile)
    grid_k = n_pad // k_tile

    # Output-row tile: grow toward 2048 (fewer H re-streams, better DMA efficiency,
    # amortized per-step overhead) but keep >=2 blocks on the parallel axis so both
    # v7x TensorCores stay busy.
    row_tile = k_tile
    for cand in (512, 1024, 2048):
        if n_pad % cand == 0 and n_pad // cand >= 2:
            row_tile = cand
    grid_rows = n_pad // row_tile

    # ---- padded / cast operands -------------------------------------------------
    x_p = jnp.zeros((n_pad, din_p), jnp.float32).at[:n, :dim_in].set(
        x.astype(jnp.float32))                       # f32 copy kept for the residual
    x_bf = x_p.astype(jnp.bfloat16)                  # bf16 input to Phase 1
    w_bf = jnp.zeros((din_p, dout_p), jnp.bfloat16).at[:dim_in, :dim_out].set(
        w.astype(jnp.bfloat16))
    b_p = jnp.zeros((1, dout_p), jnp.float32).at[:, :dim_out].set(
        jnp.reshape(b, (1, dim_out)).astype(jnp.float32))

    if a_hat.shape == (n_pad, n_pad) and a_hat.dtype == jnp.bfloat16:
        a_p = a_hat                                  # already padded + bf16: zero-copy
    else:
        na = a_hat.shape[0]
        a_p = jnp.zeros((n_pad, n_pad), jnp.bfloat16).at[:na, :na].set(
            a_hat.astype(jnp.bfloat16))

    # ---------------- Phase 1: H = X @ W (row-tiled, bf16 MXU) --------------------
    h = pl.pallas_call(
        _xw_kernel,
        out_shape=jax.ShapeDtypeStruct((n_pad, dout_p), jnp.bfloat16),
        grid=(grid_rows,),
        in_specs=[
            pl.BlockSpec((row_tile, din_p), lambda i: (i, 0)),
            pl.BlockSpec((din_p, dout_p), lambda i: (0, 0)),
        ],
        out_specs=pl.BlockSpec((row_tile, dout_p), lambda i: (i, 0)),
        compiler_params=pltpu.CompilerParams(dimension_semantics=("parallel",)),
        cost_estimate=pl.CostEstimate(
            flops=2 * n_pad * din_p * dout_p,
            transcendentals=0,
            bytes_accessed=n_pad * din_p * 2 + din_p * dout_p * 2
            + n_pad * dout_p * 2,
        ),
    )(x_bf, w_bf)

    # ---------------- Phase 2: out = relu(A_hat @ H + b) (+ x), grid (i, k) -------
    resident_h = (n_pad * dout_p * 2) <= _RESIDENT_H_MAX_BYTES
    if resident_h:
        h_spec = pl.BlockSpec((n_pad, dout_p), lambda i, k: (0, 0))   # DMA'd once
    else:
        h_spec = pl.BlockSpec((k_tile, dout_p), lambda i, k: (k, 0))  # streamed per k

    in_specs = [
        pl.BlockSpec((row_tile, k_tile), lambda i, k: (i, k)),        # A_hat (bf16)
        h_spec,                                                       # H (bf16)
        pl.BlockSpec((1, dout_p), lambda i, k: (0, 0)),               # bias (f32)
    ]
    operands = [a_p, h, b_p]
    if residual:
        in_specs.append(pl.BlockSpec((row_tile, dout_p), lambda i, k: (i, 0)))
        operands.append(x_p)

    # VMEM budget: double-buffered pipelined operands + accumulator, with headroom,
    # capped at 64 MiB so the plan also fits v7x.
    est = (
        2 * row_tile * k_tile * 2                                         # A (x2 buf)
        + (2 * n_pad * dout_p * 2 if resident_h else 2 * k_tile * dout_p * 2)  # H
        + 2 * dout_p * 4                                                  # bias
        + (2 * row_tile * dout_p * 4 if residual else 0)                  # residual x
        + 2 * row_tile * dout_p * 4                                       # out (x2 buf)
        + row_tile * dout_p * 4                                           # acc scratch
    )
    vmem_limit = int(min(max(2 * est, 16 << 20), 64 << 20))

    kernel = _make_agg_kernel(k_tile, resident_h, residual)
    out = pl.pallas_call(
        kernel,
        out_shape=jax.ShapeDtypeStruct((n_pad, dout_p), jnp.float32),
        grid=(grid_rows, grid_k),                    # reduction axis last
        in_specs=in_specs,
        out_specs=pl.BlockSpec((row_tile, dout_p), lambda i, k: (i, 0)),
        scratch_shapes=[pltpu.VMEM((row_tile, dout_p), jnp.float32)],
        compiler_params=pltpu.CompilerParams(
            dimension_semantics=("parallel", "arbitrary"),
            vmem_limit_bytes=vmem_limit),
        cost_estimate=pl.CostEstimate(
            flops=2 * n_pad * n_pad * dout_p,
            transcendentals=0,
            bytes_accessed=n_pad * n_pad * 2
            + (n_pad * dout_p * 2 if resident_h else grid_rows * n_pad * dout_p * 2)
            + n_pad * dout_p * 4 * (2 if residual else 1),
        ),
    )(*operands)

    return out[:n, :dim_out]


def build_normalized_adjacency(edge_index, num_nodes, *, pad_to=None,
                               dtype=jnp.bfloat16):
    """Dense symmetric-normalized adjacency with self loops (PyG gcn_norm).

    Scatters directly into a (pad_to, pad_to) buffer of `dtype` so the kernel
    wrapper never has to do an extra padded-copy / cast pass over O(N^2) data.
    """
    size = num_nodes if pad_to is None else pad_to
    src = edge_index[0]
    dst = edge_index[1]
    loop = jnp.arange(num_nodes, dtype=src.dtype)
    src = jnp.concatenate([src, loop])
    dst = jnp.concatenate([dst, loop])
    deg = jnp.zeros((num_nodes,), jnp.float32).at[dst].add(1.0)
    dinv = jnp.where(deg > 0, jax.lax.rsqrt(deg), 0.0)
    wgt = (dinv[src] * dinv[dst]).astype(dtype)
    a_hat = jnp.zeros((size, size), dtype).at[dst, src].add(wgt)
    return a_hat


if __name__ == "__main__":
    key = jax.random.PRNGKey(0)
    k_x, k_e, k_w, k_b = jax.random.split(key, 4)

    num_nodes = 300      # not a multiple of the tile -> exercises padding + (2,2) grid
    dim_in = 32
    dim_out = 32         # residual requires dim_in == dim_out
    num_edges = 1200
    residual = True

    x = jax.random.normal(k_x, (num_nodes, dim_in), dtype=jnp.float32)
    edge_index = jax.random.randint(
        k_e, (2, num_edges), 0, num_nodes, dtype=jnp.int32)
    w = (jax.random.normal(k_w, (dim_in, dim_out), dtype=jnp.float32)
         * (1.0 / jnp.sqrt(dim_in)))
    b = jax.random.normal(k_b, (1, dim_out), dtype=jnp.float32) * 0.01

    # Build A_hat already padded + bf16, so the kernel uses it zero-copy.
    n_pad = padded_num_nodes(num_nodes)
    a_hat_p = build_normalized_adjacency(edge_index, num_nodes, pad_to=n_pad,
                                         dtype=jnp.bfloat16)

    out = gcn_conv_layer(x, a_hat_p, w, b, residual=residual)
    jax.block_until_ready(out)

    # Pure-JAX reference matching the kernel's bf16 quantization of X/W/A_hat/H
    # (all accumulation in f32).
    x16 = x.astype(jnp.bfloat16).astype(jnp.float32)
    w16 = w.astype(jnp.bfloat16).astype(jnp.float32)
    h_ref = jnp.dot(x16, w16, precision=jax.lax.Precision.HIGHEST)
    h16 = h_ref.astype(jnp.bfloat16).astype(jnp.float32)
    a16 = a_hat_p[:num_nodes, :num_nodes].astype(jnp.float32)
    ref = jnp.maximum(
        jnp.dot(a16, h16, precision=jax.lax.Precision.HIGHEST) + b, 0.0)
    if residual:
        ref = ref + x

    assert out.shape == (num_nodes, dim_out)
    assert jnp.allclose(out, ref, atol=2e-2, rtol=2e-2), "mismatch vs reference"
    print("KERNEL_OK")
</pallas_src>

<mosaic_0001>
module attributes {stable_mosaic.version = 11 : i64} {
  func.func @_xw_kernel(%arg0: i32, %arg1: memref<256x128xbf16, #tpu.memory_space<vmem>>, %arg2: memref<128x128xbf16, #tpu.memory_space<vmem>>, %arg3: memref<256x128xbf16, #tpu.memory_space<vmem>>) attributes {dimension_semantics = [#tpu.dimension_semantics<parallel>], iteration_bounds = array<i64: 2>, scalar_prefetch = 0 : i64, scratch_operands = 0 : i64, tpu.core_type = #tpu.core_type<tc>, window_params = [{transform_indices = @transform_0, window_bounds = array<i64: 256, 128>}, {pipeline_mode = #tpu.pipeline_mode<synchronous>, transform_indices = @transform_1, window_bounds = array<i64: 128, 128>}, {transform_indices = @transform_2, window_bounds = array<i64: 256, 128>}]} {
    %c0 = arith.constant 0 : index
    %c0_0 = arith.constant 0 : index
    %0 = vector.load %arg1[%c0, %c0_0] : memref<256x128xbf16, #tpu.memory_space<vmem>>, vector<256x128xbf16>
    %c0_1 = arith.constant 0 : index
    %c0_2 = arith.constant 0 : index
    %1 = vector.load %arg2[%c0_1, %c0_2] : memref<128x128xbf16, #tpu.memory_space<vmem>>, vector<128x128xbf16>
    %cst = arith.constant dense<0.000000e+00> : vector<256x128xf32>
    %2 = tpu.matmul %0, %1, %cst {dimension_numbers = #tpu.dot_dimension_numbers<[1], [0], [0], [1], [0, 0, 1, 1], [], []>} : vector<256x128xbf16>, vector<128x128xbf16>, vector<256x128xf32> -> vector<256x128xf32>
    %3 = arith.truncf %2 : vector<256x128xf32> to vector<256x128xbf16>
    %c0_3 = arith.constant 0 : index
    %c0_4 = arith.constant 0 : index
    %4 = vector.load %arg3[%c0_3, %c0_4] : memref<256x128xbf16, #tpu.memory_space<vmem>>, vector<256x128xbf16>
    tpu.vector_store %arg3[%c0_3, %c0_4], %3 {strides = array<i32>} : memref<256x128xbf16, #tpu.memory_space<vmem>>, vector<256x128xbf16>,
    return
  }
  func.func @transform_0(%arg0: i32) -> (i32, i32) {
    %c0_i32 = arith.constant 0 : i32
    %c0_i32_0 = arith.constant 0 : i32
    return %arg0, %c0_i32 : i32, i32
  }
  func.func @transform_1(%arg0: i32) -> (i32, i32) {
    %c0_i32 = arith.constant 0 : i32
    %c0_i32_0 = arith.constant 0 : i32
    %c0_i32_1 = arith.constant 0 : i32
    return %c0_i32, %c0_i32_0 : i32, i32
  }
  func.func @transform_2(%arg0: i32) -> (i32, i32) {
    %c0_i32 = arith.constant 0 : i32
    %c0_i32_0 = arith.constant 0 : i32
    return %arg0, %c0_i32 : i32, i32
  }
}

module attributes {stable_mosaic.version = 11 : i64} {
  func.func @kernel(%arg0: i32, %arg1: i32, %arg2: memref<256x256xbf16, #tpu.memory_space<vmem>>, %arg3: memref<512x128xbf16, #tpu.memory_space<vmem>>, %arg4: memref<1x128xf32, #tpu.memory_space<vmem>>, %arg5: memref<256x128xf32, #tpu.memory_space<vmem>>, %arg6: memref<256x128xf32, #tpu.memory_space<vmem>>, %arg7: memref<256x128xf32, #tpu.memory_space<vmem>>) attributes {dimension_semantics = [#tpu.dimension_semantics<parallel>, #tpu.dimension_semantics<arbitrary>], iteration_bounds = array<i64: 2, 2>, scalar_prefetch = 0 : i64, scratch_operands = 1 : i64, tpu.core_type = #tpu.core_type<tc>, window_params = [{transform_indices = @transform_0, window_bounds = array<i64: 256, 256>}, {pipeline_mode = #tpu.pipeline_mode<synchronous>, transform_indices = @transform_1, window_bounds = array<i64: 512, 128>}, {pipeline_mode = #tpu.pipeline_mode<synchronous>, transform_indices = @transform_2, window_bounds = array<i64: 1, 128>}, {transform_indices = @transform_3, window_bounds = array<i64: 256, 128>}, {transform_indices = @transform_4, window_bounds = array<i64: 256, 128>}]} {
    %c0_i32 = arith.constant 0 : i32
    %0 = arith.cmpi eq, %arg1, %c0_i32 : i32
    %1 = arith.extui %0 : i1 to i32
    %c0_i32_0 = arith.constant 0 : i32
    %2 = arith.cmpi ne, %1, %c0_i32_0 : i32
    scf.if %2 {
      %cst_8 = arith.constant 0.000000e+00 : f32
      %15 = vector.broadcast %cst_8 : f32 to vector<256x128xf32>
      %c0_9 = arith.constant 0 : index
      %c0_10 = arith.constant 0 : index
      %16 = vector.load %arg7[%c0_9, %c0_10] : memref<256x128xf32, #tpu.memory_space<vmem>>, vector<256x128xf32>
      tpu.vector_store %arg7[%c0_9, %c0_10], %15 {strides = array<i32>} : memref<256x128xf32, #tpu.memory_space<vmem>>, vector<256x128xf32>,
    } else {
    }
    %c256_i32 = arith.constant 256 : i32
    %3 = arith.muli %arg1, %c256_i32 : i32
    %4 = tpu.assume_multiple %3, 256 : i32
    %5 = arith.index_cast %4 : i32 to index
    %c0 = arith.constant 0 : index
    %6 = vector.load %arg3[%5, %c0] : memref<512x128xbf16, #tpu.memory_space<vmem>>, vector<256x128xbf16>
    %c0_1 = arith.constant 0 : index
    %c0_2 = arith.constant 0 : index
    %7 = vector.load %arg7[%c0_1, %c0_2] : memref<256x128xf32, #tpu.memory_space<vmem>>, vector<256x128xf32>
    %c0_3 = arith.constant 0 : index
    %c0_4 = arith.constant 0 : index
    %8 = vector.load %arg2[%c0_3, %c0_4] : memref<256x256xbf16, #tpu.memory_space<vmem>>, vector<256x256xbf16>
    %cst = arith.constant dense<0.000000e+00> : vector<256x128xf32>
    %9 = tpu.matmul %8, %6, %cst {dimension_numbers = #tpu.dot_dimension_numbers<[1], [0], [0], [1], [0, 0, 1, 1], [], []>} : vector<256x256xbf16>, vector<256x128xbf16>, vector<256x128xf32> -> vector<256x128xf32>
    %10 = arith.addf %7, %9 : vector<256x128xf32>
    %c0_5 = arith.constant 0 : index
    %c0_6 = arith.constant 0 : index
    %11 = vector.load %arg7[%c0_5, %c0_6] : memref<256x128xf32, #tpu.memory_space<vmem>>, vector<256x128xf32>
    tpu.vector_store %arg7[%c0_5, %c0_6], %10 {strides = array<i32>} : memref<256x128xf32, #tpu.memory_space<vmem>>, vector<256x128xf32>,
    %c1_i32 = arith.constant 1 : i32
    %12 = arith.cmpi eq, %arg1, %c1_i32 : i32
    %13 = arith.extui %12 : i1 to i32
    %c0_i32_7 = arith.constant 0 : i32
    %14 = arith.cmpi ne, %13, %c0_i32_7 : i32
    scf.if %14 {
      %c0_8 = arith.constant 0 : index
      %c0_9 = arith.constant 0 : index
      %15 = vector.load %arg7[%c0_8, %c0_9] : memref<256x128xf32, #tpu.memory_space<vmem>>, vector<256x128xf32>
      %c0_10 = arith.constant 0 : index
      %c0_11 = arith.constant 0 : index
      %16 = vector.load %arg4[%c0_10, %c0_11] : memref<1x128xf32, #tpu.memory_space<vmem>>, vector<1x128xf32>
      %17 = vector.broadcast %16 : vector<1x128xf32> to vector<256x128xf32>
      %18 = arith.addf %15, %17 : vector<256x128xf32>
      %cst_12 = arith.constant 0.000000e+00 : f32
      %19 = vector.broadcast %cst_12 : f32 to vector<256x128xf32>
      %20 = arith.maximumf %18, %19 : vector<256x128xf32>
      %c0_13 = arith.constant 0 : index
      %c0_14 = arith.constant 0 : index
      %21 = vector.load %arg5[%c0_13, %c0_14] : memref<256x128xf32, #tpu.memory_space<vmem>>, vector<256x128xf32>
      %22 = arith.addf %20, %21 : vector<256x128xf32>
      %c0_15 = arith.constant 0 : index
      %c0_16 = arith.constant 0 : index
      %23 = vector.load %arg6[%c0_15, %c0_16] : memref<256x128xf32, #tpu.memory_space<vmem>>, vector<256x128xf32>
      tpu.vector_store %arg6[%c0_15, %c0_16], %22 {strides = array<i32>} : memref<256x128xf32, #tpu.memory_space<vmem>>, vector<256x128xf32>,
    } else {
    }
    return
  }
  func.func @transform_0(%arg0: i32, %arg1: i32) -> (i32, i32) {
    %c0_i32 = arith.constant 0 : i32
    return %arg0, %arg1 : i32, i32
  }
  func.func @transform_1(%arg0: i32, %arg1: i32) -> (i32, i32) {
    %c0_i32 = arith.constant 0 : i32
    %c0_i32_0 = arith.constant 0 : i32
    %c0_i32_1 = arith.constant 0 : i32
    return %c0_i32, %c0_i32_0 : i32, i32
  }
  func.func @transform_2(%arg0: i32, %arg1: i32) -> (i32, i32) {
    %c0_i32 = arith.constant 0 : i32
    %c0_i32_0 = arith.constant 0 : i32
    %c0_i32_1 = arith.constant 0 : i32
    return %c0_i32, %c0_i32_0 : i32, i32
  }
  func.func @transform_3(%arg0: i32, %arg1: i32) -> (i32, i32) {
    %c0_i32 = arith.constant 0 : i32
    %c0_i32_0 = arith.constant 0 : i32
    return %arg0, %c0_i32 : i32, i32
  }
  func.func @transform_4(%arg0: i32, %arg1: i32) -> (i32, i32) {
    %c0_i32 = arith.constant 0 : i32
    %c0_i32_0 = arith.constant 0 : i32
    return %arg0, %c0_i32 : i32, i32
  }
}

</mosaic_0001>

<llo_original>
// kernel: gcn_conv_layer.2
$region0: #{gcn_conv_layer.2}
  #allocation0 [shape = 'u32[]', space=smem, size = 0x4, offset = 0x4, fixed_abs, tag = 'smem constant byte address 0x4 - core index']
  #allocation1 [shape = 'u32[144,128]{1,0:T(1,128)}', space=vmem, size = 0x12000, scoped, tag = 'internal scratch']
  %s0 = inlined_call_operand.vmem [shape: bf16[512,128], index: 0, kind: input, shape index: {}]
  %s1 = inlined_call_operand.vmem [shape: bf16[128,128], index: 1, kind: input, shape index: {}]
  %s2 = inlined_call_operand.vmem [shape: bf16[512,128], index: 2, kind: output, shape index: {}]
  %s3 = sld [smem:[#allocation0]]
  $region41: #{gcn_conv_layer.2} parent=0
    _
  %s5 = ssub.s32 1, %s3
  %s6 = scalar_select 0, %s5, %s3
  loop: start=0, step=1, limit=4
  $region2: #{gcn_conv_layer.2} parent=0 // loop_pre_header
    _
  $region3: #{gcn_conv_layer.2} parent=0 // loop_header
    %s8 = sphi 0, %s12
    %p9 = scmp.ge.s32.totalorder %s8, 4
    %s18 = sphi 0, %s20
    %s21 = sphi 0, %s18
    %s22 = sphi 0, %s21
    %s38 = sphi 0, %s22
    %s42 = sphi 0, %s42
    %s44 = sphi 0, %s42
    %s45 = sphi 0, %s44
    %s59 = sphi 0, %s45
    %s65 = sphi 0, %s67
    %s68 = sphi 0, %s65
    %s69 = sphi 0, %s68
    %s85 = sphi 0, %s69
  $region4: #{gcn_conv_layer.2} parent=0 // loop_header_branch
    %11 = sbr.rel (%p9) target = $region8
  $region5: #{gcn_conv_layer.2} parent=0 // loop_body
    %s13 = ssub.s32 %s8, 1
    %s14 = ssub.s32 %s8, 2
    %s15 = sadd.s32 %s8, 1
    %s16 = ssub.s32 %s8, %s15
    %p17 = scmp.eq.s32.totalorder %s16, 0
    %s19 = sadd.s32 %s18, 1
    %s20 = scalar_select %p17, %s18, %s19
    %p23 = pneg %p17
    %p24 = scmp.eq.s32.totalorder %s8, 1
    %p25 = por %p23, %p24
    %p26 = scmp.ne.s32.totalorder %s18, %s21
    %p27 = scmp.eq.s32.totalorder %s8, 0
    %p28 = por %p26, %p27
    %p29 = scmp.ne.s32.totalorder %s18, %s21
    %p30 = scmp.eq.s32.totalorder %s13, 1
    %p31 = por %p29, %p30
    %p32 = scmp.ne.s32.totalorder %s21, %s22
    %p33 = scmp.eq.s32.totalorder %s13, 0
    %p34 = por %p32, %p33
    %p35 = scmp.ne.s32.totalorder %s21, %s22
    %p36 = scmp.eq.s32.totalorder %s14, 1
    %p37 = por %p35, %p36
    %p39 = scmp.ne.s32.totalorder %s22, %s38
    %p40 = scmp.eq.s32.totalorder %s14, 0
    %p41 = por %p39, %p40
    %s43 = sadd.s32 %s42, 1
    %p46 = scmp.eq.s32.totalorder %s8, 1
    %p47 = scmp.ne.s32.totalorder %s42, %s44
    %p48 = scmp.eq.s32.totalorder %s8, 0
    %p49 = por %p47, %p48
    %p50 = scmp.ne.s32.totalorder %s42, %s44
    %p51 = scmp.eq.s32.totalorder %s13, 1
    %p52 = por %p50, %p51
    %p53 = scmp.ne.s32.totalorder %s44, %s45
    %p54 = scmp.eq.s32.totalorder %s13, 0
    %p55 = por %p53, %p54
    %p56 = scmp.ne.s32.totalorder %s44, %s45
    %p57 = scmp.eq.s32.totalorder %s14, 1
    %p58 = por %p56, %p57
    %p60 = scmp.ne.s32.totalorder %s45, %s59
    %p61 = scmp.eq.s32.totalorder %s14, 0
    %p62 = por %p60, %p61
    %s63 = ssub.s32 %s8, %s15
    %p64 = scmp.eq.s32.totalorder %s63, 0
    %s66 = sadd.s32 %s65, 1
    %s67 = scalar_select %p64, %s65, %s66
    %p70 = pneg %p64
    %p71 = scmp.eq.s32.totalorder %s8, 1
    %p72 = por %p70, %p71
    %p73 = scmp.ne.s32.totalorder %s65, %s68
    %p74 = scmp.eq.s32.totalorder %s8, 0
    %p75 = por %p73, %p74
    %p76 = scmp.ne.s32.totalorder %s65, %s68
    %p77 = scmp.eq.s32.totalorder %s13, 1
    %p78 = por %p76, %p77
    %p79 = scmp.ne.s32.totalorder %s68, %s69
    %p80 = scmp.eq.s32.totalorder %s13, 0
    %p81 = por %p79, %p80
    %p82 = scmp.ne.s32.totalorder %s68, %s69
    %p83 = scmp.eq.s32.totalorder %s14, 1
    %p84 = por %p82, %p83
    %p86 = scmp.ne.s32.totalorder %s69, %s85
    %p87 = scmp.eq.s32.totalorder %s14, 0
    %p88 = por %p86, %p87
    %p89 = scmp.le.s32.totalorder 1, %s8
    %p90 = scmp.lt.s32.totalorder %s8, 3
    %p91 = pnand %p89, %p90
    %p92 = pneg %p91
    // Predicated region
    $region9: #{gcn_conv_layer.2} parent=5 // pred_check
      _
    $region10: #{gcn_conv_layer.2} parent=5 // pred_check_branch
      %94 = sbr.rel (%p91) target = $region12
    $region11: #{gcn_conv_layer.2} parent=5 // pred_region
      %s95 = ssub.s32 %s8, 1
      // Predicated region
      $region13: #{gcn_conv_layer.2} parent=11 // pred_check
        %p96 = pneg %p55
      $region14: #{gcn_conv_layer.2} parent=11 // pred_check_branch
        %98 = sbr.rel (%p96) target = $region16
      $region15: #{gcn_conv_layer.2} parent=11 // pred_region
        _
      $region16: #{gcn_conv_layer.2} parent=11 // pred_fallthru
        _
    $region12: #{gcn_conv_layer.2} parent=5 // pred_fallthru
      _
    %p99 = scmp.lt.s32.totalorder %s8, 2
    // Predicated region
    $region17: #{gcn_conv_layer.2} parent=5 // pred_check
      %p100 = pneg %p99
    $region18: #{gcn_conv_layer.2} parent=5 // pred_check_branch
      %102 = sbr.rel (%p100) target = $region20
    $region19: #{gcn_conv_layer.2} parent=5 // pred_region
      // Predicated region
      $region21: #{gcn_conv_layer.2} parent=19 // pred_check
        %p103 = pneg %p28
      $region22: #{gcn_conv_layer.2} parent=19 // pred_check_branch
        %105 = sbr.rel (%p103) target = $region24
      $region23: #{gcn_conv_layer.2} parent=19 // pred_region
        %s106 = smul.u32 32, %s8
        %p107 = scmp.lt.s32.totalorder %s106, 63
        %s108 = scalar_select %p107, %s106, 63
        %s109 = smul.addr %s108, 4
        %s110 = scalar_lea.vmem %s0, %s109
        %s111 = smul.u32 32, %s8
      $region24: #{gcn_conv_layer.2} parent=19 // pred_fallthru
        _
    $region20: #{gcn_conv_layer.2} parent=5 // pred_fallthru
      _
    %p112 = scmp.le.s32.totalorder 1, %s8
    %p113 = scmp.lt.s32.totalorder %s8, 3
    %p114 = pnand %p112, %p113
    %p115 = pneg %p114
    // Predicated region
    $region25: #{gcn_conv_layer.2} parent=5 // pred_check
      _
    $region26: #{gcn_conv_layer.2} parent=5 // pred_check_branch
      %117 = sbr.rel (%p114) target = $region28
    $region27: #{gcn_conv_layer.2} parent=5 // pred_region
      %s118 = ssub.s32 %s8, 1
      %s119 = smul.u32 32, %s13
      %p120 = scmp.lt.s32.totalorder %s119, 63
      %s121 = scalar_select %p120, %s119, 63
      %s122 = smul.addr %s121, 4
      %s123 = scalar_lea.vmem %s0, %s122
      %p124 = pneg %p34
      %p125 = pneg %p31
      %p126 = pneg %p55
      %p127 = pneg %p52
      %p128 = pneg %p81
      %p129 = pneg %p78
      %s130 = smul.u32 32, %s13
      %p131 = scmp.lt.s32.totalorder %s130, 63
      %s132 = scalar_select %p131, %s130, 63
      %s133 = smul.addr %s132, 4
      %s134 = scalar_lea.vmem %s2, %s133
      %s135 = smul.u32 32, %s13
      %p136 = scmp.lt.s32.totalorder %s135, 63
      %s137 = scalar_select %p136, %s135, 63
      %s138 = smul.addr %s137, 4
      %s139 = scalar_lea.vmem %s0, %s138
      %s140 = smul.u32 32, %s13
      %s141 = smul.u32 32, %s13
      %p142 = scmp.lt.s32.totalorder %s141, 63
      %s143 = scalar_select %p142, %s141, 63
      %s144 = smul.addr %s143, 4
      %s145 = scalar_lea.vmem %s2, %s144
      %s146 = smul.u32 32, %s13
      %v148 = vld [vmem:[%s139] sm:$0xf]
      %v149 = vld [vmem:[%s139 + $0x4] sm:$0xf]
      %v150 = vld [vmem:[%s139 + $0x8] sm:$0xf]
      %v151 = vld [vmem:[%s139 + $0xc] sm:$0xf]
      %v152 = vld [vmem:[%s139 + $0x10] sm:$0xf]
      %v153 = vld [vmem:[%s139 + $0x14] sm:$0xf]
      %v154 = vld [vmem:[%s139 + $0x18] sm:$0xf]
      %v155 = vld [vmem:[%s139 + $0x1c] sm:$0xf]
      %v156 = vld [vmem:[%s139 + $0x20] sm:$0xf]
      %v157 = vld [vmem:[%s139 + $0x24] sm:$0xf]
      %v158 = vld [vmem:[%s139 + $0x28] sm:$0xf]
      %v159 = vld [vmem:[%s139 + $0x2c] sm:$0xf]
      %v160 = vld [vmem:[%s139 + $0x30] sm:$0xf]
      %v161 = vld [vmem:[%s139 + $0x34] sm:$0xf]
      %v162 = vld [vmem:[%s139 + $0x38] sm:$0xf]
      %v163 = vld [vmem:[%s139 + $0x3c] sm:$0xf]
      %v164 = vld [vmem:[%s139 + $0x40] sm:$0xf]
      %v165 = vld [vmem:[%s139 + $0x44] sm:$0xf]
      %v166 = vld [vmem:[%s139 + $0x48] sm:$0xf]
      %v167 = vld [vmem:[%s139 + $0x4c] sm:$0xf]
      %v168 = vld [vmem:[%s139 + $0x50] sm:$0xf]
      %v169 = vld [vmem:[%s139 + $0x54] sm:$0xf]
      %v170 = vld [vmem:[%s139 + $0x58] sm:$0xf]
      %v171 = vld [vmem:[%s139 + $0x5c] sm:$0xf]
      %v172 = vld [vmem:[%s139 + $0x60] sm:$0xf]
      %v173 = vld [vmem:[%s139 + $0x64] sm:$0xf]
      %v174 = vld [vmem:[%s139 + $0x68] sm:$0xf]
      %v175 = vld [vmem:[%s139 + $0x6c] sm:$0xf]
      %v176 = vld [vmem:[%s139 + $0x70] sm:$0xf]
      %v177 = vld [vmem:[%s139 + $0x74] sm:$0xf]
      %v178 = vld [vmem:[%s139 + $0x78] sm:$0xf]
      %v179 = vld [vmem:[%s139 + $0x7c] sm:$0xf]
      %v180 = vld [vmem:[%s1] sm:$0xf]
      %v181 = vld [vmem:[%s1 + $0x4] sm:$0xf]
      %v182 = vld [vmem:[%s1 + $0x8] sm:$0xf]
      %v183 = vld [vmem:[%s1 + $0xc] sm:$0xf]
      %v184 = vld [vmem:[%s1 + $0x10] sm:$0xf]
      %v185 = vld [vmem:[%s1 + $0x14] sm:$0xf]
      %v186 = vld [vmem:[%s1 + $0x18] sm:$0xf]
      %v187 = vld [vmem:[%s1 + $0x1c] sm:$0xf]
      %v188 = vld [vmem:[%s1 + $0x20] sm:$0xf]
      %v189 = vld [vmem:[%s1 + $0x24] sm:$0xf]
      %v190 = vld [vmem:[%s1 + $0x28] sm:$0xf]
      %v191 = vld [vmem:[%s1 + $0x2c] sm:$0xf]
      %v192 = vld [vmem:[%s1 + $0x30] sm:$0xf]
      %v193 = vld [vmem:[%s1 + $0x34] sm:$0xf]
      %v194 = vld [vmem:[%s1 + $0x38] sm:$0xf]
      %v195 = vld [vmem:[%s1 + $0x3c] sm:$0xf]
      %v228 = vunpack.c.l.b16 %v148
      %v229 = vunpack.c.l.b16 %v149
      %v230 = vunpack.c.l.b16 %v150
      %v231 = vunpack.c.l.b16 %v151
      %v232 = vunpack.c.l.b16 %v152
      %v233 = vunpack.c.l.b16 %v153
      %v234 = vunpack.c.l.b16 %v154
      %v235 = vunpack.c.l.b16 %v155
      %v236 = vunpack.c.l.b16 %v156
      %v237 = vunpack.c.l.b16 %v157
      %v238 = vunpack.c.l.b16 %v158
      %v239 = vunpack.c.l.b16 %v159
      %v240 = vunpack.c.l.b16 %v160
      %v241 = vunpack.c.l.b16 %v161
      %v242 = vunpack.c.l.b16 %v162
      %v243 = vunpack.c.l.b16 %v163
      %v244 = vunpack.c.l.b16 %v164
      %v245 = vunpack.c.l.b16 %v165
      %v246 = vunpack.c.l.b16 %v166
      %v247 = vunpack.c.l.b16 %v167
      %v248 = vunpack.c.l.b16 %v168
      %v249 = vunpack.c.l.b16 %v169
      %v250 = vunpack.c.l.b16 %v170
      %v251 = vunpack.c.l.b16 %v171
      %v252 = vunpack.c.l.b16 %v172
      %v253 = vunpack.c.l.b16 %v173
      %v254 = vunpack.c.l.b16 %v174
      %v255 = vunpack.c.l.b16 %v175
      %v256 = vunpack.c.l.b16 %v176
      %v257 = vunpack.c.l.b16 %v177
      %v258 = vunpack.c.l.b16 %v178
      %v259 = vunpack.c.l.b16 %v179
      %v260 = vpack.c.b16 %v229, %v228
      %v261 = vpack.c.b16 %v231, %v230
      %v262 = vpack.c.b16 %v233, %v232
      %v263 = vpack.c.b16 %v235, %v234
      %v264 = vpack.c.b16 %v237, %v236
      %v265 = vpack.c.b16 %v239, %v238
      %v266 = vpack.c.b16 %v241, %v240
      %v267 = vpack.c.b16 %v243, %v242
      %v268 = vpack.c.b16 %v245, %v244
      %v269 = vpack.c.b16 %v247, %v246
      %v270 = vpack.c.b16 %v249, %v248
      %v271 = vpack.c.b16 %v251, %v250
      %v272 = vpack.c.b16 %v253, %v252
      %v273 = vpack.c.b16 %v255, %v254
      %v274 = vpack.c.b16 %v257, %v256
      %v275 = vpack.c.b16 %v259, %v258
      %v308 = vunpack.c.l.b16 %v180
      %v309 = vunpack.c.l.b16 %v181
      %v310 = vunpack.c.l.b16 %v182
      %v311 = vunpack.c.l.b16 %v183
      %v312 = vunpack.c.l.b16 %v184
      %v313 = vunpack.c.l.b16 %v185
      %v314 = vunpack.c.l.b16 %v186
      %v315 = vunpack.c.l.b16 %v187
      %v316 = vunpack.c.l.b16 %v188
      %v317 = vunpack.c.l.b16 %v189
      %v318 = vunpack.c.l.b16 %v190
      %v319 = vunpack.c.l.b16 %v191
      %v320 = vunpack.c.l.b16 %v192
      %v321 = vunpack.c.l.b16 %v193
      %v322 = vunpack.c.l.b16 %v194
      %v323 = vunpack.c.l.b16 %v195
      %v324 = vpack.c.b16 %v309, %v308
      %v325 = vpack.c.b16 %v311, %v310
      %v326 = vpack.c.b16 %v313, %v312
      %v327 = vpack.c.b16 %v315, %v314
      %v328 = vpack.c.b16 %v317, %v316
      %v329 = vpack.c.b16 %v319, %v318
      %v330 = vpack.c.b16 %v321, %v320
      %v331 = vpack.c.b16 %v323, %v322
      %340 = vmatprep.subr.bf16.mxu0 0
      %341 = vmatpush1.bf16.msra.mxu0 %v324
      %342 = vmatprep.subr.bf16.mxu0 0
      %343 = vmatpush1.bf16.msra.mxu0 %v325
      %344 = vmatprep.subr.bf16.mxu0 0
      %345 = vmatpush1.bf16.msra.mxu0 %v326
      %346 = vmatprep.subr.bf16.mxu0 0
      %347 = vmatpush1.bf16.msra.mxu0 %v327
      %348 = vmatprep.subr.bf16.mxu0 0
      %349 = vmatpush1.bf16.msra.mxu0 %v328
      %350 = vmatprep.subr.bf16.mxu0 0
      %351 = vmatpush1.bf16.msra.mxu0 %v329
      %352 = vmatprep.subr.bf16.mxu0 0
      %353 = vmatpush1.bf16.msra.mxu0 %v330
      %354 = vmatprep.subr.bf16.mxu0 0
      %355 = vmatpush1.bf16.msra.mxu0 %v331
      %356 = vmatprep.subr.bf16.mxu0 0
      %357 = vmatpush1.bf16.msra.mxu0 0
      %358 = vmatprep.subr.bf16.mxu0 0
      %359 = vmatpush1.bf16.msra.mxu0 0
      %360 = vmatprep.subr.bf16.mxu0 0
      %361 = vmatpush1.bf16.msra.mxu0 0
      %362 = vmatprep.subr.bf16.mxu0 0
      %363 = vmatpush1.bf16.msra.mxu0 0
      %364 = vmatprep.subr.bf16.mxu0 0
      %365 = vmatpush1.bf16.msra.mxu0 0
      %366 = vmatprep.subr.bf16.mxu0 0
      %367 = vmatpush1.bf16.msra.mxu0 0
      %368 = vmatprep.subr.bf16.mxu0 0
      %369 = vmatpush1.bf16.msra.mxu0 0
      %370 = vmatprep.subr.bf16.mxu0 0
      %371 = vmatpush1.bf16.msra.mxu0 0
      %372 = vmatprep.mubr.bf16.mxu0 0
      %373 = vmatmul.mubr.bf16.gmra.mrb[0].mxu0 %v260
      %v374 = vpop.f32.mrb[0].mxu0
      %v375 = vadd.f32 0.0, %v374
      %v376 = vpop.f32.mrb[0].mxu0
      %v377 = vpop.f32.mrb[0].mxu0
      %v378 = vadd.f32 0.0, %v377
      %v379 = vpop.f32.mrb[0].mxu0
      %380 = vmatprep.mubr.bf16.mxu0 0
      %381 = vmatmul.mubr.bf16.gmra.mrb[0].mxu0 %v261
      %v382 = vpop.f32.mrb[0].mxu0
      %v383 = vadd.f32 0.0, %v382
      %v384 = vpop.f32.mrb[0].mxu0
      %v385 = vpop.f32.mrb[0].mxu0
      %v386 = vadd.f32 0.0, %v385
      %v387 = vpop.f32.mrb[0].mxu0
      %388 = vmatprep.mubr.bf16.mxu0 0
      %389 = vmatmul.mubr.bf16.gmra.mrb[0].mxu0 %v262
      %v390 = vpop.f32.mrb[0].mxu0
      %v391 = vadd.f32 0.0, %v390
      %v392 = vpop.f32.mrb[0].mxu0
      %v393 = vpop.f32.mrb[0].mxu0
      %v394 = vadd.f32 0.0, %v393
      %v395 = vpop.f32.mrb[0].mxu0
      %396 = vmatprep.mubr.bf16.mxu0 0
      %397 = vmatmul.mubr.bf16.gmra.mrb[0].mxu0 %v263
      %v398 = vpop.f32.mrb[0].mxu0
      %v399 = vadd.f32 0.0, %v398
      %v400 = vpop.f32.mrb[0].mxu0
      %v401 = vpop.f32.mrb[0].mxu0
      %v402 = vadd.f32 0.0, %v401
      %v403 = vpop.f32.mrb[0].mxu0
      %404 = vmatprep.mubr.bf16.mxu0 0
      %405 = vmatmul.mubr.bf16.gmra.mrb[0].mxu0 %v264
      %v406 = vpop.f32.mrb[0].mxu0
      %v407 = vadd.f32 0.0, %v406
      %v408 = vpop.f32.mrb[0].mxu0
      %v409 = vpop.f32.mrb[0].mxu0
      %v410 = vadd.f32 0.0, %v409
      %v411 = vpop.f32.mrb[0].mxu0
      %412 = vmatprep.mubr.bf16.mxu0 0
      %413 = vmatmul.mubr.bf16.gmra.mrb[0].mxu0 %v265
      %v414 = vpop.f32.mrb[0].mxu0
      %v415 = vadd.f32 0.0, %v414
      %v416 = vpop.f32.mrb[0].mxu0
      %v417 = vpop.f32.mrb[0].mxu0
      %v418 = vadd.f32 0.0, %v417
      %v419 = vpop.f32.mrb[0].mxu0
      %420 = vmatprep.mubr.bf16.mxu0 0
      %421 = vmatmul.mubr.bf16.gmra.mrb[0].mxu0 %v266
      %v422 = vpop.f32.mrb[0].mxu0
      %v423 = vadd.f32 0.0, %v422
      %v424 = vpop.f32.mrb[0].mxu0
      %v425 = vpop.f32.mrb[0].mxu0
      %v426 = vadd.f32 0.0, %v425
      %v427 = vpop.f32.mrb[0].mxu0
      %428 = vmatprep.mubr.bf16.mxu0 0
      %429 = vmatmul.mubr.bf16.gmra.mrb[0].mxu0 %v267
      %v430 = vpop.f32.mrb[0].mxu0
      %v431 = vadd.f32 0.0, %v430
      %v432 = vpop.f32.mrb[0].mxu0
      %v433 = vpop.f32.mrb[0].mxu0
      %v434 = vadd.f32 0.0, %v433
      %v435 = vpop.f32.mrb[0].mxu0
      %436 = vmatprep.mubr.bf16.mxu0 0
      %437 = vmatmul.mubr.bf16.gmra.mrb[0].mxu0 %v268
      %v438 = vpop.f32.mrb[0].mxu0
      %v439 = vadd.f32 0.0, %v438
      %v440 = vpop.f32.mrb[0].mxu0
      %v441 = vpop.f32.mrb[0].mxu0
      %v442 = vadd.f32 0.0, %v441
      %v443 = vpop.f32.mrb[0].mxu0
      %444 = vmatprep.mubr.bf16.mxu0 0
      %445 = vmatmul.mubr.bf16.gmra.mrb[0].mxu0 %v269
      %v446 = vpop.f32.mrb[0].mxu0
      %v447 = vadd.f32 0.0, %v446
      %v448 = vpop.f32.mrb[0].mxu0
      %v449 = vpop.f32.mrb[0].mxu0
      %v450 = vadd.f32 0.0, %v449
      %v451 = vpop.f32.mrb[0].mxu0
      %452 = vmatprep.mubr.bf16.mxu0 0
      %453 = vmatmul.mubr.bf16.gmra.mrb[0].mxu0 %v270
      %v454 = vpop.f32.mrb[0].mxu0
      %v455 = vadd.f32 0.0, %v454
      %v456 = vpop.f32.mrb[0].mxu0
      %v457 = vpop.f32.mrb[0].mxu0
      %v458 = vadd.f32 0.0, %v457
      %v459 = vpop.f32.mrb[0].mxu0
      %460 = vmatprep.mubr.bf16.mxu0 0
      %461 = vmatmul.mubr.bf16.gmra.mrb[0].mxu0 %v271
      %v462 = vpop.f32.mrb[0].mxu0
      %v463 = vadd.f32 0.0, %v462
      %v464 = vpop.f32.mrb[0].mxu0
      %v465 = vpop.f32.mrb[0].mxu0
      %v466 = vadd.f32 0.0, %v465
      %v467 = vpop.f32.mrb[0].mxu0
      %468 = vmatprep.mubr.bf16.mxu0 0
      %469 = vmatmul.mubr.bf16.gmra.mrb[0].mxu0 %v272
      %v470 = vpop.f32.mrb[0].mxu0
      %v471 = vadd.f32 0.0, %v470
      %v472 = vpop.f32.mrb[0].mxu0
      %v473 = vpop.f32.mrb[0].mxu0
      %v474 = vadd.f32 0.0, %v473
      %v475 = vpop.f32.mrb[0].mxu0
      %476 = vmatprep.mubr.bf16.mxu0 0
      %477 = vmatmul.mubr.bf16.gmra.mrb[0].mxu0 %v273
      %v478 = vpop.f32.mrb[0].mxu0
      %v479 = vadd.f32 0.0, %v478
      %v480 = vpop.f32.mrb[0].mxu0
      %v481 = vpop.f32.mrb[0].mxu0
      %v482 = vadd.f32 0.0, %v481
      %v483 = vpop.f32.mrb[0].mxu0
      %484 = vmatprep.mubr.bf16.mxu0 0
      %485 = vmatmul.mubr.bf16.gmra.mrb[0].mxu0 %v274
      %v486 = vpop.f32.mrb[0].mxu0
      %v487 = vadd.f32 0.0, %v486
      %v488 = vpop.f32.mrb[0].mxu0
      %v489 = vpop.f32.mrb[0].mxu0
      %v490 = vadd.f32 0.0, %v489
      %v491 = vpop.f32.mrb[0].mxu0
      %492 = vmatprep.mubr.bf16.mxu0 0
      %493 = vmatmul.mubr.bf16.gmra.mrb[0].mxu0 %v275
      %v494 = vpop.f32.mrb[0].mxu0
      %v495 = vadd.f32 0.0, %v494
      %v496 = vpop.f32.mrb[0].mxu0
      %v497 = vpop.f32.mrb[0].mxu0
      %v498 = vadd.f32 0.0, %v497
      %v499 = vpop.f32.mrb[0].mxu0
      %500 = vdwg.mxu0
      %v501 = vpack.c.bf16 %v378, %v375
      %v502 = vpack.c.bf16 %v386, %v383
      %v503 = vpack.c.bf16 %v394, %v391
      %v504 = vpack.c.bf16 %v402, %v399
      %v505 = vpack.c.bf16 %v410, %v407
      %v506 = vpack.c.bf16 %v418, %v415
      %v507 = vpack.c.bf16 %v426, %v423
      %v508 = vpack.c.bf16 %v434, %v431
      %v509 = vpack.c.bf16 %v442, %v439
      %v510 = vpack.c.bf16 %v450, %v447
      %v511 = vpack.c.bf16 %v458, %v455
      %v512 = vpack.c.bf16 %v466, %v463
      %v513 = vpack.c.bf16 %v474, %v471
      %v514 = vpack.c.bf16 %v482, %v479
      %v515 = vpack.c.bf16 %v490, %v487
      %v516 = vpack.c.bf16 %v498, %v495
      %v533 = vunpack.c.l.b16 %v501
      %v534 = vunpack.c.h.b16 %v501
      %v535 = vunpack.c.l.b16 %v502
      %v536 = vunpack.c.h.b16 %v502
      %v537 = vunpack.c.l.b16 %v503
      %v538 = vunpack.c.h.b16 %v503
      %v539 = vunpack.c.l.b16 %v504
      %v540 = vunpack.c.h.b16 %v504
      %v541 = vunpack.c.l.b16 %v505
      %v542 = vunpack.c.h.b16 %v505
      %v543 = vunpack.c.l.b16 %v506
      %v544 = vunpack.c.h.b16 %v506
      %v545 = vunpack.c.l.b16 %v507
      %v546 = vunpack.c.h.b16 %v507
      %v547 = vunpack.c.l.b16 %v508
      %v548 = vunpack.c.h.b16 %v508
      %v549 = vunpack.c.l.b16 %v509
      %v550 = vunpack.c.h.b16 %v509
      %v551 = vunpack.c.l.b16 %v510
      %v552 = vunpack.c.h.b16 %v510
      %v553 = vunpack.c.l.b16 %v511
      %v554 = vunpack.c.h.b16 %v511
      %v555 = vunpack.c.l.b16 %v512
      %v556 = vunpack.c.h.b16 %v512
      %v557 = vunpack.c.l.b16 %v513
      %v558 = vunpack.c.h.b16 %v513
      %v559 = vunpack.c.l.b16 %v514
      %v560 = vunpack.c.h.b16 %v514
      %v561 = vunpack.c.l.b16 %v515
      %v562 = vunpack.c.h.b16 %v515
      %v563 = vunpack.c.l.b16 %v516
      %v564 = vunpack.c.h.b16 %v516
      %v565 = vpack.c.b16 %v533, %v533
      %v566 = vpack.c.b16 %v534, %v534
      %v567 = vpack.c.b16 %v535, %v535
      %v568 = vpack.c.b16 %v536, %v536
      %v569 = vpack.c.b16 %v537, %v537
      %v570 = vpack.c.b16 %v538, %v538
      %v571 = vpack.c.b16 %v539, %v539
      %v572 = vpack.c.b16 %v540, %v540
      %v573 = vpack.c.b16 %v541, %v541
      %v574 = vpack.c.b16 %v542, %v542
      %v575 = vpack.c.b16 %v543, %v543
      %v576 = vpack.c.b16 %v544, %v544
      %v577 = vpack.c.b16 %v545, %v545
      %v578 = vpack.c.b16 %v546, %v546
      %v579 = vpack.c.b16 %v547, %v547
      %v580 = vpack.c.b16 %v548, %v548
      %v581 = vpack.c.b16 %v549, %v549
      %v582 = vpack.c.b16 %v550, %v550
      %v583 = vpack.c.b16 %v551, %v551
      %v584 = vpack.c.b16 %v552, %v552
      %v585 = vpack.c.b16 %v553, %v553
      %v586 = vpack.c.b16 %v554, %v554
      %v587 = vpack.c.b16 %v555, %v555
      %v588 = vpack.c.b16 %v556, %v556
      %v589 = vpack.c.b16 %v557, %v557
      %v590 = vpack.c.b16 %v558, %v558
      %v591 = vpack.c.b16 %v559, %v559
      %v592 = vpack.c.b16 %v560, %v560
      %v593 = vpack.c.b16 %v561, %v561
      %v594 = vpack.c.b16 %v562, %v562
      %v595 = vpack.c.b16 %v563, %v563
      %v596 = vpack.c.b16 %v564, %v564
      %629 = vst [vmem:[%s145] sm:$0xf] %v565
      %630 = vst [vmem:[%s145 + $0x4] sm:$0xf] %v566
      %631 = vst [vmem:[%s145 + $0x8] sm:$0xf] %v567
      %632 = vst [vmem:[%s145 + $0xc] sm:$0xf] %v568
      %633 = vst [vmem:[%s145 + $0x10] sm:$0xf] %v569
      %634 = vst [vmem:[%s145 + $0x14] sm:$0xf] %v570
      %635 = vst [vmem:[%s145 + $0x18] sm:$0xf] %v571
      %636 = vst [vmem:[%s145 + $0x1c] sm:$0xf] %v572
      %637 = vst [vmem:[%s145 + $0x20] sm:$0xf] %v573
      %638 = vst [vmem:[%s145 + $0x24] sm:$0xf] %v574
      %639 = vst [vmem:[%s145 + $0x28] sm:$0xf] %v575
      %640 = vst [vmem:[%s145 + $0x2c] sm:$0xf] %v576
      %641 = vst [vmem:[%s145 + $0x30] sm:$0xf] %v577
      %642 = vst [vmem:[%s145 + $0x34] sm:$0xf] %v578
      %643 = vst [vmem:[%s145 + $0x38] sm:$0xf] %v579
      %644 = vst [vmem:[%s145 + $0x3c] sm:$0xf] %v580
      %645 = vst [vmem:[%s145 + $0x40] sm:$0xf] %v581
      %646 = vst [vmem:[%s145 + $0x44] sm:$0xf] %v582
      %647 = vst [vmem:[%s145 + $0x48] sm:$0xf] %v583
      %648 = vst [vmem:[%s145 + $0x4c] sm:$0xf] %v584
      %649 = vst [vmem:[%s145 + $0x50] sm:$0xf] %v585
      %650 = vst [vmem:[%s145 + $0x54] sm:$0xf] %v586
      %651 = vst [vmem:[%s145 + $0x58] sm:$0xf] %v587
      %652 = vst [vmem:[%s145 + $0x5c] sm:$0xf] %v588
      %653 = vst [vmem:[%s145 + $0x60] sm:$0xf] %v589
      %654 = vst [vmem:[%s145 + $0x64] sm:$0xf] %v590
      %655 = vst [vmem:[%s145 + $0x68] sm:$0xf] %v591
      %656 = vst [vmem:[%s145 + $0x6c] sm:$0xf] %v592
      %657 = vst [vmem:[%s145 + $0x70] sm:$0xf] %v593
      %658 = vst [vmem:[%s145 + $0x74] sm:$0xf] %v594
      %659 = vst [vmem:[%s145 + $0x78] sm:$0xf] %v595
      %660 = vst [vmem:[%s145 + $0x7c] sm:$0xf] %v596
      %s661 = smul.u32 32, %s13
      %p662 = scmp.lt.s32.totalorder %s661, 63
      %s663 = scalar_select %p662, %s661, 63
      %s664 = smul.addr %s663, 4
      %s665 = scalar_lea.vmem %s2, %s664
      // Predicated region
      $region29: #{gcn_conv_layer.2} parent=27 // pred_check
        %p666 = pneg %p78
      $region30: #{gcn_conv_layer.2} parent=27 // pred_check_branch
        %668 = sbr.rel (%p666) target = $region32
      $region31: #{gcn_conv_layer.2} parent=27 // pred_region
        %s669 = smul.u32 32, %s13
      $region32: #{gcn_conv_layer.2} parent=27 // pred_fallthru
        _
    $region28: #{gcn_conv_layer.2} parent=5 // pred_fallthru
      _
    %p670 = scmp.le.s32.totalorder 2, %s8
    // Predicated region
    $region33: #{gcn_conv_layer.2} parent=5 // pred_check
      %p671 = pneg %p670
    $region34: #{gcn_conv_layer.2} parent=5 // pred_check_branch
      %673 = sbr.rel (%p671) target = $region36
    $region35: #{gcn_conv_layer.2} parent=5 // pred_region
      %s674 = ssub.s32 %s8, 2
      // Predicated region
      $region37: #{gcn_conv_layer.2} parent=35 // pred_check
        %p675 = pneg %p84
      $region38: #{gcn_conv_layer.2} parent=35 // pred_check_branch
        %677 = sbr.rel (%p675) target = $region40
      $region39: #{gcn_conv_layer.2} parent=35 // pred_region
        %s678 = smul.u32 32, %s14
        %p679 = scmp.lt.s32.totalorder %s678, 63
        %s680 = scalar_select %p679, %s678, 63
        %s681 = smul.addr %s680, 4
        %s682 = scalar_lea.vmem %s2, %s681
      $region40: #{gcn_conv_layer.2} parent=35 // pred_fallthru
        _
    $region36: #{gcn_conv_layer.2} parent=5 // pred_fallthru
      _
  $region6: #{gcn_conv_layer.2} parent=0 // loop_footer
    %s12 = sadd.s32 1, %s8
  $region7: #{gcn_conv_layer.2} parent=0 // loop_footer_branch
    %7 = sbr.rel target = $region3
  $region8: #{gcn_conv_layer.2} parent=0 // loop_exit
    _

// kernel: gcn_conv_layer.3
$region0: #{gcn_conv_layer.3}
  #allocation0 [shape = 'u32[]', space=smem, size = 0x4, offset = 0x4, fixed_abs, tag = 'smem constant byte address 0x4 - core index']
  #allocation1 [shape = 'u32[144,128]{1,0:T(1,128)}', space=vmem, size = 0x12000, scoped, tag = 'internal scratch']
  #allocation2 [shape = 'f32[256,128]{1,0:T(8,128)}', space=vmem, size = 0x20000, scoped, tag = 'scratch operand']
  %s0 = inlined_call_operand.vmem [shape: bf16[512,512], index: 0, kind: input, shape index: {}]
  %s1 = inlined_call_operand.vmem [shape: bf16[512,128], index: 1, kind: input, shape index: {}]
  %s2 = inlined_call_operand.vmem [shape: f32[1,128], index: 2, kind: input, shape index: {}]
  %s3 = inlined_call_operand.vmem [shape: f32[512,128], index: 3, kind: input, shape index: {}]
  %s4 = inlined_call_operand.vmem [shape: f32[512,128], index: 4, kind: output, shape index: {}]
  %s5 = sld [smem:[#allocation0]]
  $region95: #{gcn_conv_layer.3} parent=0
    _
  %s7 = ssub.s32 1, %s5
  %s8 = scalar_select 0, %s7, %s5
  $region1: #{gcn_conv_layer.3} parent=0
    #allocation3 [shape = 'u8[262144]{0}', space=vmem, size = 0x40000, scoped, tag = 'input window, operand 0']
    loop: start=0, step=1, limit=6
    $region2: #{gcn_conv_layer.3} parent=1 // loop_pre_header
      _
    $region3: #{gcn_conv_layer.3} parent=1 // loop_header
      %s10 = sphi 0, %s14
      %p11 = scmp.ge.s32.totalorder %s10, 6
      %s17 = sphi 0, %s29
      %s18 = sphi 0, %s25
      %s19 = sphi 0, %s17
      %s20 = sphi 0, %s18
      %s21 = sphi 0, %s19
      %s22 = sphi 0, %s20
      %s34 = sphi 0, %s36
      %s37 = sphi 0, %s34
      %s38 = sphi 0, %s37
      %s54 = sphi 0, %s38
      %s58 = sphi 0, %s58
      %s60 = sphi 0, %s58
      %s61 = sphi 0, %s60
      %s75 = sphi 0, %s61
      %s79 = sphi 0, %s79
      %s81 = sphi 0, %s79
      %s82 = sphi 0, %s81
      %s96 = sphi 0, %s82
      %s102 = sphi 0, %s104
      %s105 = sphi 0, %s102
      %s106 = sphi 0, %s105
      %s122 = sphi 0, %s106
      %s128 = sphi 0, %s130
      %s131 = sphi 0, %s128
      %s132 = sphi 0, %s131
      %s148 = sphi 0, %s132
    $region4: #{gcn_conv_layer.3} parent=1 // loop_header_branch
      %13 = sbr.rel (%p11) target = $region8
    $region5: #{gcn_conv_layer.3} parent=1 // loop_body
      %s15 = ssub.s32 %s10, 1
      %s16 = ssub.s32 %s10, 2
      %s23 = sadd.s32 1, %s18
      %p24 = scmp.ge.s32.totalorder %s23, 2
      %s25 = scalar_select %p24, 0, %s23
      %s26 = sadd.s32 1, %s17
      %s27 = scalar_select %p24, %s26, %s17
      %p28 = scmp.ge.s32.totalorder %s27, 2
      %s29 = scalar_select %p28, 0, %s27
      %s30 = ssub.s32 %s17, %s29
      %s31 = ssub.s32 %s18, %s25
      %s32 = sor.u32 %s30, %s31
      %p33 = scmp.eq.s32.totalorder %s32, 0
      %s35 = sadd.s32 %s34, 1
      %s36 = scalar_select %p33, %s34, %s35
      %p39 = pneg %p33
      %p40 = scmp.eq.s32.totalorder %s10, 3
      %p41 = por %p39, %p40
      %p42 = scmp.ne.s32.totalorder %s34, %s37
      %p43 = scmp.eq.s32.totalorder %s10, 0
      %p44 = por %p42, %p43
      %p45 = scmp.ne.s32.totalorder %s34, %s37
      %p46 = scmp.eq.s32.totalorder %s15, 3
      %p47 = por %p45, %p46
      %p48 = scmp.ne.s32.totalorder %s37, %s38
      %p49 = scmp.eq.s32.totalorder %s15, 0
      %p50 = por %p48, %p49
      %p51 = scmp.ne.s32.totalorder %s37, %s38
      %p52 = scmp.eq.s32.totalorder %s16, 3
      %p53 = por %p51, %p52
      %p55 = scmp.ne.s32.totalorder %s38, %s54
      %p56 = scmp.eq.s32.totalorder %s16, 0
      %p57 = por %p55, %p56
      %s59 = sadd.s32 %s58, 1
      %p62 = scmp.eq.s32.totalorder %s10, 3
      %p63 = scmp.ne.s32.totalorder %s58, %s60
      %p64 = scmp.eq.s32.totalorder %s10, 0
      %p65 = por %p63, %p64
      %p66 = scmp.ne.s32.totalorder %s58, %s60
      %p67 = scmp.eq.s32.totalorder %s15, 3
      %p68 = por %p66, %p67
      %p69 = scmp.ne.s32.totalorder %s60, %s61
      %p70 = scmp.eq.s32.totalorder %s15, 0
      %p71 = por %p69, %p70
      %p72 = scmp.ne.s32.totalorder %s60, %s61
      %p73 = scmp.eq.s32.totalorder %s16, 3
      %p74 = por %p72, %p73
      %p76 = scmp.ne.s32.totalorder %s61, %s75
      %p77 = scmp.eq.s32.totalorder %s16, 0
      %p78 = por %p76, %p77
      %s80 = sadd.s32 %s79, 1
      %p83 = scmp.eq.s32.totalorder %s10, 3
      %p84 = scmp.ne.s32.totalorder %s79, %s81
      %p85 = scmp.eq.s32.totalorder %s10, 0
      %p86 = por %p84, %p85
      %p87 = scmp.ne.s32.totalorder %s79, %s81
      %p88 = scmp.eq.s32.totalorder %s15, 3
      %p89 = por %p87, %p88
      %p90 = scmp.ne.s32.totalorder %s81, %s82
      %p91 = scmp.eq.s32.totalorder %s15, 0
      %p92 = por %p90, %p91
      %p93 = scmp.ne.s32.totalorder %s81, %s82
      %p94 = scmp.eq.s32.totalorder %s16, 3
      %p95 = por %p93, %p94
      %p97 = scmp.ne.s32.totalorder %s82, %s96
      %p98 = scmp.eq.s32.totalorder %s16, 0
      %p99 = por %p97, %p98
      %s100 = ssub.s32 %s17, %s29
      %p101 = scmp.eq.s32.totalorder %s100, 0
      %s103 = sadd.s32 %s102, 1
      %s104 = scalar_select %p101, %s102, %s103
      %p107 = pneg %p101
      %p108 = scmp.eq.s32.totalorder %s10, 3
      %p109 = por %p107, %p108
      %p110 = scmp.ne.s32.totalorder %s102, %s105
      %p111 = scmp.eq.s32.totalorder %s10, 0
      %p112 = por %p110, %p111
      %p113 = scmp.ne.s32.totalorder %s102, %s105
      %p114 = scmp.eq.s32.totalorder %s15, 3
      %p115 = por %p113, %p114
      %p116 = scmp.ne.s32.totalorder %s105, %s106
      %p117 = scmp.eq.s32.totalorder %s15, 0
      %p118 = por %p116, %p117
      %p119 = scmp.ne.s32.totalorder %s105, %s106
      %p120 = scmp.eq.s32.totalorder %s16, 3
      %p121 = por %p119, %p120
      %p123 = scmp.ne.s32.totalorder %s106, %s122
      %p124 = scmp.eq.s32.totalorder %s16, 0
      %p125 = por %p123, %p124
      %s126 = ssub.s32 %s17, %s29
      %p127 = scmp.eq.s32.totalorder %s126, 0
      %s129 = sadd.s32 %s128, 1
      %s130 = scalar_select %p127, %s128, %s129
      %p133 = pneg %p127
      %p134 = scmp.eq.s32.totalorder %s10, 3
      %p135 = por %p133, %p134
      %p136 = scmp.ne.s32.totalorder %s128, %s131
      %p137 = scmp.eq.s32.totalorder %s10, 0
      %p138 = por %p136, %p137
      %p139 = scmp.ne.s32.totalorder %s128, %s131
      %p140 = scmp.eq.s32.totalorder %s15, 3
      %p141 = por %p139, %p140
      %p142 = scmp.ne.s32.totalorder %s131, %s132
      %p143 = scmp.eq.s32.totalorder %s15, 0
      %p144 = por %p142, %p143
      %p145 = scmp.ne.s32.totalorder %s131, %s132
      %p146 = scmp.eq.s32.totalorder %s16, 3
      %p147 = por %p145, %p146
      %p149 = scmp.ne.s32.totalorder %s132, %s148
      %p150 = scmp.eq.s32.totalorder %s16, 0
      %p151 = por %p149, %p150
      %p152 = scmp.le.s32.totalorder 1, %s10
      %p153 = scmp.lt.s32.totalorder %s10, 5
      %p154 = pnand %p152, %p153
      %p155 = pneg %p154
      // Predicated region
      $region9: #{gcn_conv_layer.3} parent=5 // pred_check
        _
      $region10: #{gcn_conv_layer.3} parent=5 // pred_check_branch
        %157 = sbr.rel (%p154) target = $region12
      $region11: #{gcn_conv_layer.3} parent=5 // pred_region
        %s158 = ssub.s32 %s10, 1
        // Predicated region
        $region13: #{gcn_conv_layer.3} parent=11 // pred_check
          %p159 = pneg %p71
        $region14: #{gcn_conv_layer.3} parent=11 // pred_check_branch
          %161 = sbr.rel (%p159) target = $region16
        $region15: #{gcn_conv_layer.3} parent=11 // pred_region
          _
        $region16: #{gcn_conv_layer.3} parent=11 // pred_fallthru
          _
        // Predicated region
        $region17: #{gcn_conv_layer.3} parent=11 // pred_check
          %p162 = pneg %p92
        $region18: #{gcn_conv_layer.3} parent=11 // pred_check_branch
          %164 = sbr.rel (%p162) target = $region20
        $region19: #{gcn_conv_layer.3} parent=11 // pred_region
          _
        $region20: #{gcn_conv_layer.3} parent=11 // pred_fallthru
          _
      $region12: #{gcn_conv_layer.3} parent=5 // pred_fallthru
        _
      %p165 = scmp.lt.s32.totalorder %s10, 4
      // Predicated region
      $region21: #{gcn_conv_layer.3} parent=5 // pred_check
        %p166 = pneg %p165
      $region22: #{gcn_conv_layer.3} parent=5 // pred_check_branch
        %168 = sbr.rel (%p166) target = $region24
      $region23: #{gcn_conv_layer.3} parent=5 // pred_region
        // Predicated region
        $region25: #{gcn_conv_layer.3} parent=23 // pred_check
          %p169 = pneg %p44
        $region26: #{gcn_conv_layer.3} parent=23 // pred_check_branch
          %171 = sbr.rel (%p169) target = $region28
        $region27: #{gcn_conv_layer.3} parent=23 // pred_region
          %s172 = sand.u32 %s34, 1
          %s173 = sand.u32 %s34, 1
          %s174 = smul.addr %s173, 256
          %s175 = scalar_lea.vmem [#allocation3], %s174
          %s176 = smul.u32 32, %s17
          %s177 = smul.u32 2, %s18
          %s178 = smul.addr %s176, 4
          %s179 = sadd.s32 %s177, %s178
          %s180 = smul.addr %s179, 4
          %s181 = scalar_lea.vmem %s0, %s180
          // Predicated region
          $region29: #{gcn_conv_layer.3} parent=27 // pred_check
            _
          $region30: #{gcn_conv_layer.3} parent=27 // pred_check_branch
            %183 = sbr.rel (0) target = $region32
          $region31: #{gcn_conv_layer.3} parent=27 // pred_region
            // Predicated region
            $region33: #{gcn_conv_layer.3} parent=31 // pred_check
              _
            $region34: #{gcn_conv_layer.3} parent=31 // pred_check_branch
              %185 = sbr.rel (0) target = $region36
            $region35: #{gcn_conv_layer.3} parent=31 // pred_region
              // Predicated region
              $region48: #{gcn_conv_layer.3} parent=35 // pred_check
                _
              $region49: #{gcn_conv_layer.3} parent=35 // pred_check_branch
                %262 = sbr.rel (0) target = $region51
              $region50: #{gcn_conv_layer.3} parent=35 // pred_region
                loop: start=0, step=1, limit=1
                $region52: #{gcn_conv_layer.3} parent=50 // loop_pre_header
                  _
                $region53: #{gcn_conv_layer.3} parent=50 // loop_header
                  %s264 = sphi 0, %s268
                  %p265 = scmp.ge.s32.totalorder %s264, 1
                  %s269 = sphi %s181, %s181
                  %s270 = sphi %s175, %s175
                $region54: #{gcn_conv_layer.3} parent=50 // loop_header_branch
                  %267 = sbr.rel (%p265) target = $region58
                $region55: #{gcn_conv_layer.3} parent=50 // loop_body
                  %v271 = vld [vmem:[%s269] sm:$0xff]
                  %272 = vst [vmem:[%s270] sm:$0xff] %v271
                  %v273 = vld [vmem:[%s269 + $0x10] sm:$0xff]
                  %274 = vst [vmem:[%s270 + $0x8] sm:$0xff] %v273
                  %v275 = vld [vmem:[%s269 + $0x20] sm:$0xff]
                  %276 = vst [vmem:[%s270 + $0x10] sm:$0xff] %v275
                  %v277 = vld [vmem:[%s269 + $0x30] sm:$0xff]
                  %278 = vst [vmem:[%s270 + $0x18] sm:$0xff] %v277
                  %v279 = vld [vmem:[%s269 + $0x40] sm:$0xff]
                  %280 = vst [vmem:[%s270 + $0x20] sm:$0xff] %v279
                  %v281 = vld [vmem:[%s269 + $0x50] sm:$0xff]
                  %282 = vst [vmem:[%s270 + $0x28] sm:$0xff] %v281
                  %v283 = vld [vmem:[%s269 + $0x60] sm:$0xff]
                  %284 = vst [vmem:[%s270 + $0x30] sm:$0xff] %v283
                  %v285 = vld [vmem:[%s269 + $0x70] sm:$0xff]
                  %286 = vst [vmem:[%s270 + $0x38] sm:$0xff] %v285
                  %v287 = vld [vmem:[%s269 + $0x80] sm:$0xff]
                  %288 = vst [vmem:[%s270 + $0x40] sm:$0xff] %v287
                  %v289 = vld [vmem:[%s269 + $0x90] sm:$0xff]
                  %290 = vst [vmem:[%s270 + $0x48] sm:$0xff] %v289
                  %v291 = vld [vmem:[%s269 + $0xa0] sm:$0xff]
                  %292 = vst [vmem:[%s270 + $0x50] sm:$0xff] %v291
                  %v293 = vld [vmem:[%s269 + $0xb0] sm:$0xff]
                  %294 = vst [vmem:[%s270 + $0x58] sm:$0xff] %v293
                  %v295 = vld [vmem:[%s269 + $0xc0] sm:$0xff]
                  %296 = vst [vmem:[%s270 + $0x60] sm:$0xff] %v295
                  %v297 = vld [vmem:[%s269 + $0xd0] sm:$0xff]
                  %298 = vst [vmem:[%s270 + $0x68] sm:$0xff] %v297
                  %v299 = vld [vmem:[%s269 + $0xe0] sm:$0xff]
                  %300 = vst [vmem:[%s270 + $0x70] sm:$0xff] %v299
                  %v301 = vld [vmem:[%s269 + $0xf0] sm:$0xff]
                  %302 = vst [vmem:[%s270 + $0x78] sm:$0xff] %v301
                  %v303 = vld [vmem:[%s269 + $0x100] sm:$0xff]
                  %304 = vst [vmem:[%s270 + $0x80] sm:$0xff] %v303
                  %v305 = vld [vmem:[%s269 + $0x110] sm:$0xff]
                  %306 = vst [vmem:[%s270 + $0x88] sm:$0xff] %v305
                  %v307 = vld [vmem:[%s269 + $0x120] sm:$0xff]
                  %308 = vst [vmem:[%s270 + $0x90] sm:$0xff] %v307
                  %v309 = vld [vmem:[%s269 + $0x130] sm:$0xff]
                  %310 = vst [vmem:[%s270 + $0x98] sm:$0xff] %v309
                  %v311 = vld [vmem:[%s269 + $0x140] sm:$0xff]
                  %312 = vst [vmem:[%s270 + $0xa0] sm:$0xff] %v311
                  %v313 = vld [vmem:[%s269 + $0x150] sm:$0xff]
                  %314 = vst [vmem:[%s270 + $0xa8] sm:$0xff] %v313
                  %v315 = vld [vmem:[%s269 + $0x160] sm:$0xff]
                  %316 = vst [vmem:[%s270 + $0xb0] sm:$0xff] %v315
                  %v317 = vld [vmem:[%s269 + $0x170] sm:$0xff]
                  %318 = vst [vmem:[%s270 + $0xb8] sm:$0xff] %v317
                  %v319 = vld [vmem:[%s269 + $0x180] sm:$0xff]
                  %320 = vst [vmem:[%s270 + $0xc0] sm:$0xff] %v319
                  %v321 = vld [vmem:[%s269 + $0x190] sm:$0xff]
                  %322 = vst [vmem:[%s270 + $0xc8] sm:$0xff] %v321
                  %v323 = vld [vmem:[%s269 + $0x1a0] sm:$0xff]
                  %324 = vst [vmem:[%s270 + $0xd0] sm:$0xff] %v323
                  %v325 = vld [vmem:[%s269 + $0x1b0] sm:$0xff]
                  %326 = vst [vmem:[%s270 + $0xd8] sm:$0xff] %v325
                  %v327 = vld [vmem:[%s269 + $0x1c0] sm:$0xff]
                  %328 = vst [vmem:[%s270 + $0xe0] sm:$0xff] %v327
                  %v329 = vld [vmem:[%s269 + $0x1d0] sm:$0xff]
                  %330 = vst [vmem:[%s270 + $0xe8] sm:$0xff] %v329
                  %v331 = vld [vmem:[%s269 + $0x1e0] sm:$0xff]
                  %332 = vst [vmem:[%s270 + $0xf0] sm:$0xff] %v331
                  %v333 = vld [vmem:[%s269 + $0x1f0] sm:$0xff]
                  %334 = vst [vmem:[%s270 + $0xf8] sm:$0xff] %v333
                $region56: #{gcn_conv_layer.3} parent=50 // loop_footer
                  %s268 = sadd.s32 1, %s264
                $region57: #{gcn_conv_layer.3} parent=50 // loop_footer_branch
                  %263 = sbr.rel target = $region53
                $region58: #{gcn_conv_layer.3} parent=50 // loop_exit
                  _
              $region51: #{gcn_conv_layer.3} parent=35 // pred_fallthru
                _
              // Predicated region
              $region59: #{gcn_conv_layer.3} parent=35 // pred_check
                _
              $region60: #{gcn_conv_layer.3} parent=35 // pred_check_branch
                %336 = sbr.rel target = $region62
              $region61: #{gcn_conv_layer.3} parent=35 // pred_region
                _
              $region62: #{gcn_conv_layer.3} parent=35 // pred_fallthru
                _
            $region36: #{gcn_conv_layer.3} parent=31 // pred_fallthru
              _
            // Predicated region
            $region37: #{gcn_conv_layer.3} parent=31 // pred_check
              _
            $region38: #{gcn_conv_layer.3} parent=31 // pred_check_branch
              %187 = sbr.rel target = $region40
            $region39: #{gcn_conv_layer.3} parent=31 // pred_region
              loop: start=0, step=1, limit=1
              $region41: #{gcn_conv_layer.3} parent=39 // loop_pre_header
                _
              $region42: #{gcn_conv_layer.3} parent=39 // loop_header
                %s190 = sphi 0, %s194
                %p191 = scmp.ge.s32.totalorder %s190, 1
                %s195 = sphi %s181, %s181
                %s196 = sphi %s175, %s175
              $region43: #{gcn_conv_layer.3} parent=39 // loop_header_branch
                %193 = sbr.rel (%p191) target = $region47
              $region44: #{gcn_conv_layer.3} parent=39 // loop_body
                %v197 = vld [vmem:[%s195] sm:$0xff]
                %198 = vst [vmem:[%s196] sm:$0xff] %v197
                %v199 = vld [vmem:[%s195 + $0x10] sm:$0xff]
                %200 = vst [vmem:[%s196 + $0x8] sm:$0xff] %v199
                %v201 = vld [vmem:[%s195 + $0x20] sm:$0xff]
                %202 = vst [vmem:[%s196 + $0x10] sm:$0xff] %v201
                %v203 = vld [vmem:[%s195 + $0x30] sm:$0xff]
                %204 = vst [vmem:[%s196 + $0x18] sm:$0xff] %v203
                %v205 = vld [vmem:[%s195 + $0x40] sm:$0xff]
                %206 = vst [vmem:[%s196 + $0x20] sm:$0xff] %v205
                %v207 = vld [vmem:[%s195 + $0x50] sm:$0xff]
                %208 = vst [vmem:[%s196 + $0x28] sm:$0xff] %v207
                %v209 = vld [vmem:[%s195 + $0x60] sm:$0xff]
                %210 = vst [vmem:[%s196 + $0x30] sm:$0xff] %v209
                %v211 = vld [vmem:[%s195 + $0x70] sm:$0xff]
                %212 = vst [vmem:[%s196 + $0x38] sm:$0xff] %v211
                %v213 = vld [vmem:[%s195 + $0x80] sm:$0xff]
                %214 = vst [vmem:[%s196 + $0x40] sm:$0xff] %v213
                %v215 = vld [vmem:[%s195 + $0x90] sm:$0xff]
                %216 = vst [vmem:[%s196 + $0x48] sm:$0xff] %v215
                %v217 = vld [vmem:[%s195 + $0xa0] sm:$0xff]
                %218 = vst [vmem:[%s196 + $0x50] sm:$0xff] %v217
                %v219 = vld [vmem:[%s195 + $0xb0] sm:$0xff]
                %220 = vst [vmem:[%s196 + $0x58] sm:$0xff] %v219
                %v221 = vld [vmem:[%s195 + $0xc0] sm:$0xff]
                %222 = vst [vmem:[%s196 + $0x60] sm:$0xff] %v221
                %v223 = vld [vmem:[%s195 + $0xd0] sm:$0xff]
                %224 = vst [vmem:[%s196 + $0x68] sm:$0xff] %v223
                %v225 = vld [vmem:[%s195 + $0xe0] sm:$0xff]
                %226 = vst [vmem:[%s196 + $0x70] sm:$0xff] %v225
                %v227 = vld [vmem:[%s195 + $0xf0] sm:$0xff]
                %228 = vst [vmem:[%s196 + $0x78] sm:$0xff] %v227
                %v229 = vld [vmem:[%s195 + $0x100] sm:$0xff]
                %230 = vst [vmem:[%s196 + $0x80] sm:$0xff] %v229
                %v231 = vld [vmem:[%s195 + $0x110] sm:$0xff]
                %232 = vst [vmem:[%s196 + $0x88] sm:$0xff] %v231
                %v233 = vld [vmem:[%s195 + $0x120] sm:$0xff]
                %234 = vst [vmem:[%s196 + $0x90] sm:$0xff] %v233
                %v235 = vld [vmem:[%s195 + $0x130] sm:$0xff]
                %236 = vst [vmem:[%s196 + $0x98] sm:$0xff] %v235
                %v237 = vld [vmem:[%s195 + $0x140] sm:$0xff]
                %238 = vst [vmem:[%s196 + $0xa0] sm:$0xff] %v237
                %v239 = vld [vmem:[%s195 + $0x150] sm:$0xff]
                %240 = vst [vmem:[%s196 + $0xa8] sm:$0xff] %v239
                %v241 = vld [vmem:[%s195 + $0x160] sm:$0xff]
                %242 = vst [vmem:[%s196 + $0xb0] sm:$0xff] %v241
                %v243 = vld [vmem:[%s195 + $0x170] sm:$0xff]
                %244 = vst [vmem:[%s196 + $0xb8] sm:$0xff] %v243
                %v245 = vld [vmem:[%s195 + $0x180] sm:$0xff]
                %246 = vst [vmem:[%s196 + $0xc0] sm:$0xff] %v245
                %v247 = vld [vmem:[%s195 + $0x190] sm:$0xff]
                %248 = vst [vmem:[%s196 + $0xc8] sm:$0xff] %v247
                %v249 = vld [vmem:[%s195 + $0x1a0] sm:$0xff]
                %250 = vst [vmem:[%s196 + $0xd0] sm:$0xff] %v249
                %v251 = vld [vmem:[%s195 + $0x1b0] sm:$0xff]
                %252 = vst [vmem:[%s196 + $0xd8] sm:$0xff] %v251
                %v253 = vld [vmem:[%s195 + $0x1c0] sm:$0xff]
                %254 = vst [vmem:[%s196 + $0xe0] sm:$0xff] %v253
                %v255 = vld [vmem:[%s195 + $0x1d0] sm:$0xff]
                %256 = vst [vmem:[%s196 + $0xe8] sm:$0xff] %v255
                %v257 = vld [vmem:[%s195 + $0x1e0] sm:$0xff]
                %258 = vst [vmem:[%s196 + $0xf0] sm:$0xff] %v257
                %v259 = vld [vmem:[%s195 + $0x1f0] sm:$0xff]
                %260 = vst [vmem:[%s196 + $0xf8] sm:$0xff] %v259
              $region45: #{gcn_conv_layer.3} parent=39 // loop_footer
                %s194 = sadd.s32 1, %s190
              $region46: #{gcn_conv_layer.3} parent=39 // loop_footer_branch
                %189 = sbr.rel target = $region42
              $region47: #{gcn_conv_layer.3} parent=39 // loop_exit
                _
            $region40: #{gcn_conv_layer.3} parent=31 // pred_fallthru
              _
          $region32: #{gcn_conv_layer.3} parent=27 // pred_fallthru
            _
          %337 = vnop
        $region28: #{gcn_conv_layer.3} parent=23 // pred_fallthru
          _
        // Predicated region
        $region63: #{gcn_conv_layer.3} parent=23 // pred_check
          %p338 = pneg %p112
        $region64: #{gcn_conv_layer.3} parent=23 // pred_check_branch
          %340 = sbr.rel (%p338) target = $region66
        $region65: #{gcn_conv_layer.3} parent=23 // pred_region
          %s341 = smul.u32 32, %s17
          %p342 = scmp.lt.s32.totalorder %s341, 63
          %s343 = scalar_select %p342, %s341, 63
          %s344 = smul.addr %s343, 8
          %s345 = scalar_lea.vmem %s3, %s344
          %s346 = smul.u32 32, %s17
        $region66: #{gcn_conv_layer.3} parent=23 // pred_fallthru
          _
      $region24: #{gcn_conv_layer.3} parent=5 // pred_fallthru
        _
      %p347 = scmp.le.s32.totalorder 1, %s10
      %p348 = scmp.lt.s32.totalorder %s10, 5
      %p349 = pnand %p347, %p348
      %p350 = pneg %p349
      // Predicated region
      $region67: #{gcn_conv_layer.3} parent=5 // pred_check
        _
      $region68: #{gcn_conv_layer.3} parent=5 // pred_check_branch
        %352 = sbr.rel (%p349) target = $region70
      $region69: #{gcn_conv_layer.3} parent=5 // pred_region
        %s353 = ssub.s32 %s10, 1
        %s354 = sand.u32 %s37, 1
        %s355 = sand.u32 %s37, 1
        %s356 = smul.addr %s355, 256
        %s357 = scalar_lea.vmem [#allocation3], %s356
        // Predicated region
        $region71: #{gcn_conv_layer.3} parent=69 // pred_check
          %p358 = pneg %p50
        $region72: #{gcn_conv_layer.3} parent=69 // pred_check_branch
          %360 = sbr.rel (%p358) target = $region74
        $region73: #{gcn_conv_layer.3} parent=69 // pred_region
          _
        $region74: #{gcn_conv_layer.3} parent=69 // pred_fallthru
          _
        %s361 = sand.u32 %s37, 1
        %s362 = sand.u32 %s37, 1
        %s363 = smul.addr %s362, 256
        %s364 = scalar_lea.vmem [#allocation3], %s363
        %p365 = pneg %p50
        %p366 = pneg %p47
        %p367 = pneg %p71
        %p368 = pneg %p68
        %p369 = pneg %p92
        %p370 = pneg %p89
        %s371 = smul.u32 32, %s19
        %p372 = scmp.lt.s32.totalorder %s371, 63
        %s373 = scalar_select %p372, %s371, 63
        %s374 = smul.addr %s373, 8
        %s375 = scalar_lea.vmem %s3, %s374
        %p376 = pneg %p118
        %p377 = pneg %p115
        %p378 = pneg %p144
        %p379 = pneg %p141
        %s380 = smul.u32 32, %s19
        %p381 = scmp.lt.s32.totalorder %s380, 63
        %s382 = scalar_select %p381, %s380, 63
        %s383 = smul.addr %s382, 8
        %s384 = scalar_lea.vmem %s4, %s383
        %s385 = smul.u32 32, %s19
        %s386 = smul.u32 2, %s20
        %s387 = smul.u32 32, %s19
        %p388 = scmp.lt.s32.totalorder %s387, 63
        %s389 = scalar_select %p388, %s387, 63
        %s390 = smul.addr %s389, 8
        %s391 = scalar_lea.vmem %s3, %s390
        %s392 = smul.u32 32, %s19
        %s393 = smul.u32 32, %s19
        %p394 = scmp.lt.s32.totalorder %s393, 63
        %s395 = scalar_select %p394, %s393, 63
        %s396 = smul.addr %s395, 8
        %s397 = scalar_lea.vmem %s4, %s396
        %s398 = smul.u32 32, %s19
        %p400 = scmp.eq.s32.totalorder %s20, 0
        // Predicated region
        $region75: #{gcn_conv_layer.3} parent=69 // pred_check
          %p401 = pneg %p400
        $region76: #{gcn_conv_layer.3} parent=69 // pred_check_branch
          %403 = sbr.rel (%p401) target = $region78
        $region77: #{gcn_conv_layer.3} parent=69 // pred_region
          %404 = vst [vmem:[#allocation2] sm:$0xff] 0.0
          %405 = vst [vmem:[#allocation2 + $0x8] sm:$0xff] 0.0
          %406 = vst [vmem:[#allocation2 + $0x10] sm:$0xff] 0.0
          %407 = vst [vmem:[#allocation2 + $0x18] sm:$0xff] 0.0
          %408 = vst [vmem:[#allocation2 + $0x20] sm:$0xff] 0.0
          %409 = vst [vmem:[#allocation2 + $0x28] sm:$0xff] 0.0
          %410 = vst [vmem:[#allocation2 + $0x30] sm:$0xff] 0.0
          %411 = vst [vmem:[#allocation2 + $0x38] sm:$0xff] 0.0
          %412 = vst [vmem:[#allocation2 + $0x40] sm:$0xff] 0.0
          %413 = vst [vmem:[#allocation2 + $0x48] sm:$0xff] 0.0
          %414 = vst [vmem:[#allocation2 + $0x50] sm:$0xff] 0.0
          %415 = vst [vmem:[#allocation2 + $0x58] sm:$0xff] 0.0
          %416 = vst [vmem:[#allocation2 + $0x60] sm:$0xff] 0.0
          %417 = vst [vmem:[#allocation2 + $0x68] sm:$0xff] 0.0
          %418 = vst [vmem:[#allocation2 + $0x70] sm:$0xff] 0.0
          %419 = vst [vmem:[#allocation2 + $0x78] sm:$0xff] 0.0
          %420 = vst [vmem:[#allocation2 + $0x80] sm:$0xff] 0.0
          %421 = vst [vmem:[#allocation2 + $0x88] sm:$0xff] 0.0
          %422 = vst [vmem:[#allocation2 + $0x90] sm:$0xff] 0.0
          %423 = vst [vmem:[#allocation2 + $0x98] sm:$0xff] 0.0
          %424 = vst [vmem:[#allocation2 + $0xa0] sm:$0xff] 0.0
          %425 = vst [vmem:[#allocation2 + $0xa8] sm:$0xff] 0.0
          %426 = vst [vmem:[#allocation2 + $0xb0] sm:$0xff] 0.0
          %427 = vst [vmem:[#allocation2 + $0xb8] sm:$0xff] 0.0
          %428 = vst [vmem:[#allocation2 + $0xc0] sm:$0xff] 0.0
          %429 = vst [vmem:[#allocation2 + $0xc8] sm:$0xff] 0.0
          %430 = vst [vmem:[#allocation2 + $0xd0] sm:$0xff] 0.0
          %431 = vst [vmem:[#allocation2 + $0xd8] sm:$0xff] 0.0
          %432 = vst [vmem:[#allocation2 + $0xe0] sm:$0xff] 0.0
          %433 = vst [vmem:[#allocation2 + $0xe8] sm:$0xff] 0.0
          %434 = vst [vmem:[#allocation2 + $0xf0] sm:$0xff] 0.0
          %435 = vst [vmem:[#allocation2 + $0xf8] sm:$0xff] 0.0
        $region78: #{gcn_conv_layer.3} parent=69 // pred_fallthru
          _
        %s436 = smul.u32 %s20, 256
        %s437 = sshra.s32 %s436, 3
        %s438 = sand.u32 %s436, 7
        %s439 = smul.addr %s437, 4
        %s440 = scalar_lea.vmem %s1, %s439
        %v441 = vld [vmem:[%s440] sm:$0xf]
        %v442 = vld [vmem:[%s440 + $0x4] sm:$0xf]
        %v443 = vld [vmem:[%s440 + $0x8] sm:$0xf]
        %v444 = vld [vmem:[%s440 + $0xc] sm:$0xf]
        %v445 = vld [vmem:[%s440 + $0x10] sm:$0xf]
        %v446 = vld [vmem:[%s440 + $0x14] sm:$0xf]
        %v447 = vld [vmem:[%s440 + $0x18] sm:$0xf]
        %v448 = vld [vmem:[%s440 + $0x1c] sm:$0xf]
        %v449 = vld [vmem:[%s440 + $0x20] sm:$0xf]
        %v450 = vld [vmem:[%s440 + $0x24] sm:$0xf]
        %v451 = vld [vmem:[%s440 + $0x28] sm:$0xf]
        %v452 = vld [vmem:[%s440 + $0x2c] sm:$0xf]
        %v453 = vld [vmem:[%s440 + $0x30] sm:$0xf]
        %v454 = vld [vmem:[%s440 + $0x34] sm:$0xf]
        %v455 = vld [vmem:[%s440 + $0x38] sm:$0xf]
        %v456 = vld [vmem:[%s440 + $0x3c] sm:$0xf]
        %v457 = vld [vmem:[%s440 + $0x40] sm:$0xf]
        %v458 = vld [vmem:[%s440 + $0x44] sm:$0xf]
        %v459 = vld [vmem:[%s440 + $0x48] sm:$0xf]
        %v460 = vld [vmem:[%s440 + $0x4c] sm:$0xf]
        %v461 = vld [vmem:[%s440 + $0x50] sm:$0xf]
        %v462 = vld [vmem:[%s440 + $0x54] sm:$0xf]
        %v463 = vld [vmem:[%s440 + $0x58] sm:$0xf]
        %v464 = vld [vmem:[%s440 + $0x5c] sm:$0xf]
        %v465 = vld [vmem:[%s440 + $0x60] sm:$0xf]
        %v466 = vld [vmem:[%s440 + $0x64] sm:$0xf]
        %v467 = vld [vmem:[%s440 + $0x68] sm:$0xf]
        %v468 = vld [vmem:[%s440 + $0x6c] sm:$0xf]
        %v469 = vld [vmem:[%s440 + $0x70] sm:$0xf]
        %v470 = vld [vmem:[%s440 + $0x74] sm:$0xf]
        %v471 = vld [vmem:[%s440 + $0x78] sm:$0xf]
        %v472 = vld [vmem:[%s440 + $0x7c] sm:$0xf]
        %v473 = vld [vmem:[#allocation2] sm:$0xff]
        %v474 = vld [vmem:[#allocation2 + $0x8] sm:$0xff]
        %v475 = vld [vmem:[#allocation2 + $0x10] sm:$0xff]
        %v476 = vld [vmem:[#allocation2 + $0x18] sm:$0xff]
        %v477 = vld [vmem:[#allocation2 + $0x20] sm:$0xff]
        %v478 = vld [vmem:[#allocation2 + $0x28] sm:$0xff]
        %v479 = vld [vmem:[#allocation2 + $0x30] sm:$0xff]
        %v480 = vld [vmem:[#allocation2 + $0x38] sm:$0xff]
        %v481 = vld [vmem:[#allocation2 + $0x40] sm:$0xff]
        %v482 = vld [vmem:[#allocation2 + $0x48] sm:$0xff]
        %v483 = vld [vmem:[#allocation2 + $0x50] sm:$0xff]
        %v484 = vld [vmem:[#allocation2 + $0x58] sm:$0xff]
        %v485 = vld [vmem:[#allocation2 + $0x60] sm:$0xff]
        %v486 = vld [vmem:[#allocation2 + $0x68] sm:$0xff]
        %v487 = vld [vmem:[#allocation2 + $0x70] sm:$0xff]
        %v488 = vld [vmem:[#allocation2 + $0x78] sm:$0xff]
        %v489 = vld [vmem:[#allocation2 + $0x80] sm:$0xff]
        %v490 = vld [vmem:[#allocation2 + $0x88] sm:$0xff]
        %v491 = vld [vmem:[#allocation2 + $0x90] sm:$0xff]
        %v492 = vld [vmem:[#allocation2 + $0x98] sm:$0xff]
        %v493 = vld [vmem:[#allocation2 + $0xa0] sm:$0xff]
        %v494 = vld [vmem:[#allocation2 + $0xa8] sm:$0xff]
        %v495 = vld [vmem:[#allocation2 + $0xb0] sm:$0xff]
        %v496 = vld [vmem:[#allocation2 + $0xb8] sm:$0xff]
        %v497 = vld [vmem:[#allocation2 + $0xc0] sm:$0xff]
        %v498 = vld [vmem:[#allocation2 + $0xc8] sm:$0xff]
        %v499 = vld [vmem:[#allocation2 + $0xd0] sm:$0xff]
        %v500 = vld [vmem:[#allocation2 + $0xd8] sm:$0xff]
        %v501 = vld [vmem:[#allocation2 + $0xe0] sm:$0xff]
        %v502 = vld [vmem:[#allocation2 + $0xe8] sm:$0xff]
        %v503 = vld [vmem:[#allocation2 + $0xf0] sm:$0xff]
        %v504 = vld [vmem:[#allocation2 + $0xf8] sm:$0xff]
        %v505 = vld [vmem:[%s357] sm:$0xff]
        %v506 = vld [vmem:[%s357 + $0x8] sm:$0xff]
        %v507 = vld [vmem:[%s357 + $0x10] sm:$0xff]
        %v508 = vld [vmem:[%s357 + $0x18] sm:$0xff]
        %v509 = vld [vmem:[%s357 + $0x20] sm:$0xff]
        %v510 = vld [vmem:[%s357 + $0x28] sm:$0xff]
        %v511 = vld [vmem:[%s357 + $0x30] sm:$0xff]
        %v512 = vld [vmem:[%s357 + $0x38] sm:$0xff]
        %v513 = vld [vmem:[%s357 + $0x40] sm:$0xff]
        %v514 = vld [vmem:[%s357 + $0x48] sm:$0xff]
        %v515 = vld [vmem:[%s357 + $0x50] sm:$0xff]
        %v516 = vld [vmem:[%s357 + $0x58] sm:$0xff]
        %v517 = vld [vmem:[%s357 + $0x60] sm:$0xff]
        %v518 = vld [vmem:[%s357 + $0x68] sm:$0xff]
        %v519 = vld [vmem:[%s357 + $0x70] sm:$0xff]
        %v520 = vld [vmem:[%s357 + $0x78] sm:$0xff]
        %v521 = vld [vmem:[%s357 + $0x80] sm:$0xff]
        %v522 = vld [vmem:[%s357 + $0x88] sm:$0xff]
        %v523 = vld [vmem:[%s357 + $0x90] sm:$0xff]
        %v524 = vld [vmem:[%s357 + $0x98] sm:$0xff]
        %v525 = vld [vmem:[%s357 + $0xa0] sm:$0xff]
        %v526 = vld [vmem:[%s357 + $0xa8] sm:$0xff]
        %v527 = vld [vmem:[%s357 + $0xb0] sm:$0xff]
        %v528 = vld [vmem:[%s357 + $0xb8] sm:$0xff]
        %v529 = vld [vmem:[%s357 + $0xc0] sm:$0xff]
        %v530 = vld [vmem:[%s357 + $0xc8] sm:$0xff]
        %v531 = vld [vmem:[%s357 + $0xd0] sm:$0xff]
        %v532 = vld [vmem:[%s357 + $0xd8] sm:$0xff]
        %v533 = vld [vmem:[%s357 + $0xe0] sm:$0xff]
        %v534 = vld [vmem:[%s357 + $0xe8] sm:$0xff]
        %v535 = vld [vmem:[%s357 + $0xf0] sm:$0xff]
        %v536 = vld [vmem:[%s357 + $0xf8] sm:$0xff]
        %v569 = vunpack.c.l.b16 %v505
        %v570 = vunpack.c.h.b16 %v505
        %v571 = vunpack.c.l.b16 %v506
        %v572 = vunpack.c.h.b16 %v506
        %v573 = vunpack.c.l.b16 %v507
        %v574 = vunpack.c.h.b16 %v507
        %v575 = vunpack.c.l.b16 %v508
        %v576 = vunpack.c.h.b16 %v508
        %v577 = vunpack.c.l.b16 %v509
        %v578 = vunpack.c.h.b16 %v509
        %v579 = vunpack.c.l.b16 %v510
        %v580 = vunpack.c.h.b16 %v510
        %v581 = vunpack.c.l.b16 %v511
        %v582 = vunpack.c.h.b16 %v511
        %v583 = vunpack.c.l.b16 %v512
        %v584 = vunpack.c.h.b16 %v512
        %v585 = vunpack.c.l.b16 %v513
        %v586 = vunpack.c.h.b16 %v513
        %v587 = vunpack.c.l.b16 %v514
        %v588 = vunpack.c.h.b16 %v514
        %v589 = vunpack.c.l.b16 %v515
        %v590 = vunpack.c.h.b16 %v515
        %v591 = vunpack.c.l.b16 %v516
        %v592 = vunpack.c.h.b16 %v516
        %v593 = vunpack.c.l.b16 %v517
        %v594 = vunpack.c.h.b16 %v517
        %v595 = vunpack.c.l.b16 %v518
        %v596 = vunpack.c.h.b16 %v518
        %v597 = vunpack.c.l.b16 %v519
        %v598 = vunpack.c.h.b16 %v519
        %v599 = vunpack.c.l.b16 %v520
        %v600 = vunpack.c.h.b16 %v520
        %v601 = vunpack.c.l.b16 %v521
        %v602 = vunpack.c.h.b16 %v521
        %v603 = vunpack.c.l.b16 %v522
        %v604 = vunpack.c.h.b16 %v522
        %v605 = vunpack.c.l.b16 %v523
        %v606 = vunpack.c.h.b16 %v523
        %v607 = vunpack.c.l.b16 %v524
        %v608 = vunpack.c.h.b16 %v524
        %v609 = vunpack.c.l.b16 %v525
        %v610 = vunpack.c.h.b16 %v525
        %v611 = vunpack.c.l.b16 %v526
        %v612 = vunpack.c.h.b16 %v526
        %v613 = vunpack.c.l.b16 %v527
        %v614 = vunpack.c.h.b16 %v527
        %v615 = vunpack.c.l.b16 %v528
        %v616 = vunpack.c.h.b16 %v528
        %v617 = vunpack.c.l.b16 %v529
        %v618 = vunpack.c.h.b16 %v529
        %v619 = vunpack.c.l.b16 %v530
        %v620 = vunpack.c.h.b16 %v530
        %v621 = vunpack.c.l.b16 %v531
        %v622 = vunpack.c.h.b16 %v531
        %v623 = vunpack.c.l.b16 %v532
        %v624 = vunpack.c.h.b16 %v532
        %v625 = vunpack.c.l.b16 %v533
        %v626 = vunpack.c.h.b16 %v533
        %v627 = vunpack.c.l.b16 %v534
        %v628 = vunpack.c.h.b16 %v534
        %v629 = vunpack.c.l.b16 %v535
        %v630 = vunpack.c.h.b16 %v535
        %v631 = vunpack.c.l.b16 %v536
        %v632 = vunpack.c.h.b16 %v536
        %v633 = vpack.c.b16 %v571, %v569
        %v634 = vpack.c.b16 %v572, %v570
        %v635 = vpack.c.b16 %v575, %v573
        %v636 = vpack.c.b16 %v576, %v574
        %v637 = vpack.c.b16 %v579, %v577
        %v638 = vpack.c.b16 %v580, %v578
        %v639 = vpack.c.b16 %v583, %v581
        %v640 = vpack.c.b16 %v584, %v582
        %v641 = vpack.c.b16 %v587, %v585
        %v642 = vpack.c.b16 %v588, %v586
        %v643 = vpack.c.b16 %v591, %v589
        %v644 = vpack.c.b16 %v592, %v590
        %v645 = vpack.c.b16 %v595, %v593
        %v646 = vpack.c.b16 %v596, %v594
        %v647 = vpack.c.b16 %v599, %v597
        %v648 = vpack.c.b16 %v600, %v598
        %v649 = vpack.c.b16 %v603, %v601
        %v650 = vpack.c.b16 %v604, %v602
        %v651 = vpack.c.b16 %v607, %v605
        %v652 = vpack.c.b16 %v608, %v606
        %v653 = vpack.c.b16 %v611, %v609
        %v654 = vpack.c.b16 %v612, %v610
        %v655 = vpack.c.b16 %v615, %v613
        %v656 = vpack.c.b16 %v616, %v614
        %v657 = vpack.c.b16 %v619, %v617
        %v658 = vpack.c.b16 %v620, %v618
        %v659 = vpack.c.b16 %v623, %v621
        %v660 = vpack.c.b16 %v624, %v622
        %v661 = vpack.c.b16 %v627, %v625
        %v662 = vpack.c.b16 %v628, %v626
        %v663 = vpack.c.b16 %v631, %v629
        %v664 = vpack.c.b16 %v632, %v630
        %v729 = vunpack.c.l.b16 %v441
        %v730 = vunpack.c.l.b16 %v442
        %v731 = vunpack.c.l.b16 %v443
        %v732 = vunpack.c.l.b16 %v444
        %v733 = vunpack.c.l.b16 %v445
        %v734 = vunpack.c.l.b16 %v446
        %v735 = vunpack.c.l.b16 %v447
        %v736 = vunpack.c.l.b16 %v448
        %v737 = vunpack.c.l.b16 %v449
        %v738 = vunpack.c.l.b16 %v450
        %v739 = vunpack.c.l.b16 %v451
        %v740 = vunpack.c.l.b16 %v452
        %v741 = vunpack.c.l.b16 %v453
        %v742 = vunpack.c.l.b16 %v454
        %v743 = vunpack.c.l.b16 %v455
        %v744 = vunpack.c.l.b16 %v456
        %v745 = vunpack.c.l.b16 %v457
        %v746 = vunpack.c.l.b16 %v458
        %v747 = vunpack.c.l.b16 %v459
        %v748 = vunpack.c.l.b16 %v460
        %v749 = vunpack.c.l.b16 %v461
        %v750 = vunpack.c.l.b16 %v462
        %v751 = vunpack.c.l.b16 %v463
        %v752 = vunpack.c.l.b16 %v464
        %v753 = vunpack.c.l.b16 %v465
        %v754 = vunpack.c.l.b16 %v466
        %v755 = vunpack.c.l.b16 %v467
        %v756 = vunpack.c.l.b16 %v468
        %v757 = vunpack.c.l.b16 %v469
        %v758 = vunpack.c.l.b16 %v470
        %v759 = vunpack.c.l.b16 %v471
        %v760 = vunpack.c.l.b16 %v472
        %v761 = vpack.c.b16 %v730, %v729
        %v762 = vpack.c.b16 %v732, %v731
        %v763 = vpack.c.b16 %v734, %v733
        %v764 = vpack.c.b16 %v736, %v735
        %v765 = vpack.c.b16 %v738, %v737
        %v766 = vpack.c.b16 %v740, %v739
        %v767 = vpack.c.b16 %v742, %v741
        %v768 = vpack.c.b16 %v744, %v743
        %v769 = vpack.c.b16 %v746, %v745
        %v770 = vpack.c.b16 %v748, %v747
        %v771 = vpack.c.b16 %v750, %v749
        %v772 = vpack.c.b16 %v752, %v751
        %v773 = vpack.c.b16 %v754, %v753
        %v774 = vpack.c.b16 %v756, %v755
        %v775 = vpack.c.b16 %v758, %v757
        %v776 = vpack.c.b16 %v760, %v759
        %793 = vmatprep.subr.bf16.mxu0 0
        %794 = vmatpush1.bf16.msra.mxu0 %v761
        %795 = vmatprep.subr.bf16.mxu0 0
        %796 = vmatpush1.bf16.msra.mxu0 %v762
        %797 = vmatprep.subr.bf16.mxu0 0
        %798 = vmatpush1.bf16.msra.mxu0 %v763
        %799 = vmatprep.subr.bf16.mxu0 0
        %800 = vmatpush1.bf16.msra.mxu0 %v764
        %801 = vmatprep.subr.bf16.mxu0 0
        %802 = vmatpush1.bf16.msra.mxu0 %v765
        %803 = vmatprep.subr.bf16.mxu0 0
        %804 = vmatpush1.bf16.msra.mxu0 %v766
        %805 = vmatprep.subr.bf16.mxu0 0
        %806 = vmatpush1.bf16.msra.mxu0 %v767
        %807 = vmatprep.subr.bf16.mxu0 0
        %808 = vmatpush1.bf16.msra.mxu0 %v768
        %809 = vmatprep.subr.bf16.mxu0 0
        %810 = vmatpush1.bf16.msra.mxu0 %v769
        %811 = vmatprep.subr.bf16.mxu0 0
        %812 = vmatpush1.bf16.msra.mxu0 %v770
        %813 = vmatprep.subr.bf16.mxu0 0
        %814 = vmatpush1.bf16.msra.mxu0 %v771
        %815 = vmatprep.subr.bf16.mxu0 0
        %816 = vmatpush1.bf16.msra.mxu0 %v772
        %817 = vmatprep.subr.bf16.mxu0 0
        %818 = vmatpush1.bf16.msra.mxu0 %v773
        %819 = vmatprep.subr.bf16.mxu0 0
        %820 = vmatpush1.bf16.msra.mxu0 %v774
        %821 = vmatprep.subr.bf16.mxu0 0
        %822 = vmatpush1.bf16.msra.mxu0 %v775
        %823 = vmatprep.subr.bf16.mxu0 0
        %824 = vmatpush1.bf16.msra.mxu0 %v776
        %825 = vmatprep.mubr.bf16.mxu0 %v634
        %826 = vmatmul.mubr.bf16.gmra.mrb[0].mxu0 %v633
        %v827 = vpop.f32.mrb[0].mxu0
        %v828 = vadd.f32 0.0, %v827
        %v829 = vpop.f32.mrb[0].mxu0
        %v830 = vpop.f32.mrb[0].mxu0
        %v831 = vadd.f32 0.0, %v830
        %v832 = vpop.f32.mrb[0].mxu0
        %833 = vmatprep.mubr.bf16.mxu0 %v636
        %834 = vmatmul.mubr.bf16.gmra.mrb[0].mxu0 %v635
        %v835 = vpop.f32.mrb[0].mxu0
        %v836 = vadd.f32 0.0, %v835
        %v837 = vpop.f32.mrb[0].mxu0
        %v838 = vpop.f32.mrb[0].mxu0
        %v839 = vadd.f32 0.0, %v838
        %v840 = vpop.f32.mrb[0].mxu0
        %841 = vmatprep.mubr.bf16.mxu0 %v638
        %842 = vmatmul.mubr.bf16.gmra.mrb[0].mxu0 %v637
        %v843 = vpop.f32.mrb[0].mxu0
        %v844 = vadd.f32 0.0, %v843
        %v845 = vpop.f32.mrb[0].mxu0
        %v846 = vpop.f32.mrb[0].mxu0
        %v847 = vadd.f32 0.0, %v846
        %v848 = vpop.f32.mrb[0].mxu0
        %849 = vmatprep.mubr.bf16.mxu0 %v640
        %850 = vmatmul.mubr.bf16.gmra.mrb[0].mxu0 %v639
        %v851 = vpop.f32.mrb[0].mxu0
        %v852 = vadd.f32 0.0, %v851
        %v853 = vpop.f32.mrb[0].mxu0
        %v854 = vpop.f32.mrb[0].mxu0
        %v855 = vadd.f32 0.0, %v854
        %v856 = vpop.f32.mrb[0].mxu0
        %857 = vmatprep.mubr.bf16.mxu0 %v642
        %858 = vmatmul.mubr.bf16.gmra.mrb[0].mxu0 %v641
        %v859 = vpop.f32.mrb[0].mxu0
        %v860 = vadd.f32 0.0, %v859
        %v861 = vpop.f32.mrb[0].mxu0
        %v862 = vpop.f32.mrb[0].mxu0
        %v863 = vadd.f32 0.0, %v862
        %v864 = vpop.f32.mrb[0].mxu0
        %865 = vmatprep.mubr.bf16.mxu0 %v644
        %866 = vmatmul.mubr.bf16.gmra.mrb[0].mxu0 %v643
        %v867 = vpop.f32.mrb[0].mxu0
        %v868 = vadd.f32 0.0, %v867
        %v869 = vpop.f32.mrb[0].mxu0
        %v870 = vpop.f32.mrb[0].mxu0
        %v871 = vadd.f32 0.0, %v870
        %v872 = vpop.f32.mrb[0].mxu0
        %873 = vmatprep.mubr.bf16.mxu0 %v646
        %874 = vmatmul.mubr.bf16.gmra.mrb[0].mxu0 %v645
        %v875 = vpop.f32.mrb[0].mxu0
        %v876 = vadd.f32 0.0, %v875
        %v877 = vpop.f32.mrb[0].mxu0
        %v878 = vpop.f32.mrb[0].mxu0
        %v879 = vadd.f32 0.0, %v878
        %v880 = vpop.f32.mrb[0].mxu0
        %881 = vmatprep.mubr.bf16.mxu0 %v648
        %882 = vmatmul.mubr.bf16.gmra.mrb[0].mxu0 %v647
        %v883 = vpop.f32.mrb[0].mxu0
        %v884 = vadd.f32 0.0, %v883
        %v885 = vpop.f32.mrb[0].mxu0
        %v886 = vpop.f32.mrb[0].mxu0
        %v887 = vadd.f32 0.0, %v886
        %v888 = vpop.f32.mrb[0].mxu0
        %889 = vmatprep.mubr.bf16.mxu0 %v650
        %890 = vmatmul.mubr.bf16.gmra.mrb[0].mxu0 %v649
        %v891 = vpop.f32.mrb[0].mxu0
        %v892 = vadd.f32 0.0, %v891
        %v893 = vpop.f32.mrb[0].mxu0
        %v894 = vpop.f32.mrb[0].mxu0
        %v895 = vadd.f32 0.0, %v894
        %v896 = vpop.f32.mrb[0].mxu0
        %897 = vmatprep.mubr.bf16.mxu0 %v652
        %898 = vmatmul.mubr.bf16.gmra.mrb[0].mxu0 %v651
        %v899 = vpop.f32.mrb[0].mxu0
        %v900 = vadd.f32 0.0, %v899
        %v901 = vpop.f32.mrb[0].mxu0
        %v902 = vpop.f32.mrb[0].mxu0
        %v903 = vadd.f32 0.0, %v902
        %v904 = vpop.f32.mrb[0].mxu0
        %905 = vmatprep.mubr.bf16.mxu0 %v654
        %906 = vmatmul.mubr.bf16.gmra.mrb[0].mxu0 %v653
        %v907 = vpop.f32.mrb[0].mxu0
        %v908 = vadd.f32 0.0, %v907
        %v909 = vpop.f32.mrb[0].mxu0
        %v910 = vpop.f32.mrb[0].mxu0
        %v911 = vadd.f32 0.0, %v910
        %v912 = vpop.f32.mrb[0].mxu0
        %913 = vmatprep.mubr.bf16.mxu0 %v656
        %914 = vmatmul.mubr.bf16.gmra.mrb[0].mxu0 %v655
        %v915 = vpop.f32.mrb[0].mxu0
        %v916 = vadd.f32 0.0, %v915
        %v917 = vpop.f32.mrb[0].mxu0
        %v918 = vpop.f32.mrb[0].mxu0
        %v919 = vadd.f32 0.0, %v918
        %v920 = vpop.f32.mrb[0].mxu0
        %921 = vmatprep.mubr.bf16.mxu0 %v658
        %922 = vmatmul.mubr.bf16.gmra.mrb[0].mxu0 %v657
        %v923 = vpop.f32.mrb[0].mxu0
        %v924 = vadd.f32 0.0, %v923
        %v925 = vpop.f32.mrb[0].mxu0
        %v926 = vpop.f32.mrb[0].mxu0
        %v927 = vadd.f32 0.0, %v926
        %v928 = vpop.f32.mrb[0].mxu0
        %929 = vmatprep.mubr.bf16.mxu0 %v660
        %930 = vmatmul.mubr.bf16.gmra.mrb[0].mxu0 %v659
        %v931 = vpop.f32.mrb[0].mxu0
        %v932 = vadd.f32 0.0, %v931
        %v933 = vpop.f32.mrb[0].mxu0
        %v934 = vpop.f32.mrb[0].mxu0
        %v935 = vadd.f32 0.0, %v934
        %v936 = vpop.f32.mrb[0].mxu0
        %937 = vmatprep.mubr.bf16.mxu0 %v662
        %938 = vmatmul.mubr.bf16.gmra.mrb[0].mxu0 %v661
        %v939 = vpop.f32.mrb[0].mxu0
        %v940 = vadd.f32 0.0, %v939
        %v941 = vpop.f32.mrb[0].mxu0
        %v942 = vpop.f32.mrb[0].mxu0
        %v943 = vadd.f32 0.0, %v942
        %v944 = vpop.f32.mrb[0].mxu0
        %945 = vmatprep.mubr.bf16.mxu0 %v664
        %946 = vmatmul.mubr.bf16.gmra.mrb[0].mxu0 %v663
        %v947 = vpop.f32.mrb[0].mxu0
        %v948 = vadd.f32 0.0, %v947
        %v949 = vpop.f32.mrb[0].mxu0
        %v950 = vpop.f32.mrb[0].mxu0
        %v951 = vadd.f32 0.0, %v950
        %v952 = vpop.f32.mrb[0].mxu0
        %953 = vdwg.mxu0
        %v954 = vadd.f32 %v473, %v828
        %v955 = vadd.f32 %v474, %v831
        %v956 = vadd.f32 %v475, %v836
        %v957 = vadd.f32 %v476, %v839
        %v958 = vadd.f32 %v477, %v844
        %v959 = vadd.f32 %v478, %v847
        %v960 = vadd.f32 %v479, %v852
        %v961 = vadd.f32 %v480, %v855
        %v962 = vadd.f32 %v481, %v860
        %v963 = vadd.f32 %v482, %v863
        %v964 = vadd.f32 %v483, %v868
        %v965 = vadd.f32 %v484, %v871
        %v966 = vadd.f32 %v485, %v876
        %v967 = vadd.f32 %v486, %v879
        %v968 = vadd.f32 %v487, %v884
        %v969 = vadd.f32 %v488, %v887
        %v970 = vadd.f32 %v489, %v892
        %v971 = vadd.f32 %v490, %v895
        %v972 = vadd.f32 %v491, %v900
        %v973 = vadd.f32 %v492, %v903
        %v974 = vadd.f32 %v493, %v908
        %v975 = vadd.f32 %v494, %v911
        %v976 = vadd.f32 %v495, %v916
        %v977 = vadd.f32 %v496, %v919
        %v978 = vadd.f32 %v497, %v924
        %v979 = vadd.f32 %v498, %v927
        %v980 = vadd.f32 %v499, %v932
        %v981 = vadd.f32 %v500, %v935
        %v982 = vadd.f32 %v501, %v940
        %v983 = vadd.f32 %v502, %v943
        %v984 = vadd.f32 %v503, %v948
        %v985 = vadd.f32 %v504, %v951
        %986 = vst [vmem:[#allocation2] sm:$0xff] %v954
        %987 = vst [vmem:[#allocation2 + $0x8] sm:$0xff] %v955
        %988 = vst [vmem:[#allocation2 + $0x10] sm:$0xff] %v956
        %989 = vst [vmem:[#allocation2 + $0x18] sm:$0xff] %v957
        %990 = vst [vmem:[#allocation2 + $0x20] sm:$0xff] %v958
        %991 = vst [vmem:[#allocation2 + $0x28] sm:$0xff] %v959
        %992 = vst [vmem:[#allocation2 + $0x30] sm:$0xff] %v960
        %993 = vst [vmem:[#allocation2 + $0x38] sm:$0xff] %v961
        %994 = vst [vmem:[#allocation2 + $0x40] sm:$0xff] %v962
        %995 = vst [vmem:[#allocation2 + $0x48] sm:$0xff] %v963
        %996 = vst [vmem:[#allocation2 + $0x50] sm:$0xff] %v964
        %997 = vst [vmem:[#allocation2 + $0x58] sm:$0xff] %v965
        %998 = vst [vmem:[#allocation2 + $0x60] sm:$0xff] %v966
        %999 = vst [vmem:[#allocation2 + $0x68] sm:$0xff] %v967
        %1000 = vst [vmem:[#allocation2 + $0x70] sm:$0xff] %v968
        %1001 = vst [vmem:[#allocation2 + $0x78] sm:$0xff] %v969
        %1002 = vst [vmem:[#allocation2 + $0x80] sm:$0xff] %v970
        %1003 = vst [vmem:[#allocation2 + $0x88] sm:$0xff] %v971
        %1004 = vst [vmem:[#allocation2 + $0x90] sm:$0xff] %v972
        %1005 = vst [vmem:[#allocation2 + $0x98] sm:$0xff] %v973
        %1006 = vst [vmem:[#allocation2 + $0xa0] sm:$0xff] %v974
        %1007 = vst [vmem:[#allocation2 + $0xa8] sm:$0xff] %v975
        %1008 = vst [vmem:[#allocation2 + $0xb0] sm:$0xff] %v976
        %1009 = vst [vmem:[#allocation2 + $0xb8] sm:$0xff] %v977
        %1010 = vst [vmem:[#allocation2 + $0xc0] sm:$0xff] %v978
        %1011 = vst [vmem:[#allocation2 + $0xc8] sm:$0xff] %v979
        %1012 = vst [vmem:[#allocation2 + $0xd0] sm:$0xff] %v980
        %1013 = vst [vmem:[#allocation2 + $0xd8] sm:$0xff] %v981
        %1014 = vst [vmem:[#allocation2 + $0xe0] sm:$0xff] %v982
        %1015 = vst [vmem:[#allocation2 + $0xe8] sm:$0xff] %v983
        %1016 = vst [vmem:[#allocation2 + $0xf0] sm:$0xff] %v984
        %1017 = vst [vmem:[#allocation2 + $0xf8] sm:$0xff] %v985
        %p1018 = scmp.eq.s32.totalorder %s20, 1
        // Predicated region
        $region79: #{gcn_conv_layer.3} parent=69 // pred_check
          %p1019 = pneg %p1018
        $region80: #{gcn_conv_layer.3} parent=69 // pred_check_branch
          %1021 = sbr.rel (%p1019) target = $region82
        $region81: #{gcn_conv_layer.3} parent=69 // pred_region
          %v1022 = vld [vmem:[#allocation2] sm:$0xff]
          %v1023 = vld [vmem:[#allocation2 + $0x8] sm:$0xff]
          %v1024 = vld [vmem:[#allocation2 + $0x10] sm:$0xff]
          %v1025 = vld [vmem:[#allocation2 + $0x18] sm:$0xff]
          %v1026 = vld [vmem:[#allocation2 + $0x20] sm:$0xff]
          %v1027 = vld [vmem:[#allocation2 + $0x28] sm:$0xff]
          %v1028 = vld [vmem:[#allocation2 + $0x30] sm:$0xff]
          %v1029 = vld [vmem:[#allocation2 + $0x38] sm:$0xff]
          %v1030 = vld [vmem:[#allocation2 + $0x40] sm:$0xff]
          %v1031 = vld [vmem:[#allocation2 + $0x48] sm:$0xff]
          %v1032 = vld [vmem:[#allocation2 + $0x50] sm:$0xff]
          %v1033 = vld [vmem:[#allocation2 + $0x58] sm:$0xff]
          %v1034 = vld [vmem:[#allocation2 + $0x60] sm:$0xff]
          %v1035 = vld [vmem:[#allocation2 + $0x68] sm:$0xff]
          %v1036 = vld [vmem:[#allocation2 + $0x70] sm:$0xff]
          %v1037 = vld [vmem:[#allocation2 + $0x78] sm:$0xff]
          %v1038 = vld [vmem:[#allocation2 + $0x80] sm:$0xff]
          %v1039 = vld [vmem:[#allocation2 + $0x88] sm:$0xff]
          %v1040 = vld [vmem:[#allocation2 + $0x90] sm:$0xff]
          %v1041 = vld [vmem:[#allocation2 + $0x98] sm:$0xff]
          %v1042 = vld [vmem:[#allocation2 + $0xa0] sm:$0xff]
          %v1043 = vld [vmem:[#allocation2 + $0xa8] sm:$0xff]
          %v1044 = vld [vmem:[#allocation2 + $0xb0] sm:$0xff]
          %v1045 = vld [vmem:[#allocation2 + $0xb8] sm:$0xff]
          %v1046 = vld [vmem:[#allocation2 + $0xc0] sm:$0xff]
          %v1047 = vld [vmem:[#allocation2 + $0xc8] sm:$0xff]
          %v1048 = vld [vmem:[#allocation2 + $0xd0] sm:$0xff]
          %v1049 = vld [vmem:[#allocation2 + $0xd8] sm:$0xff]
          %v1050 = vld [vmem:[#allocation2 + $0xe0] sm:$0xff]
          %v1051 = vld [vmem:[#allocation2 + $0xe8] sm:$0xff]
          %v1052 = vld [vmem:[#allocation2 + $0xf0] sm:$0xff]
          %v1053 = vld [vmem:[#allocation2 + $0xf8] sm:$0xff]
          %v1054 = vld [vmem:[%s2] sm:$0x1]
          %v1056 = vlaneseq
          %v1057 = vshrl.u32 %v1056, 7
          %v1058 = vsub.s32 0, %v1057
          %v1059 = vrot.slane %v1054, %v1058
          %v1061 = vadd.f32 %v1022, %v1059
          %v1062 = vadd.f32 %v1023, %v1059
          %v1063 = vadd.f32 %v1024, %v1059
          %v1064 = vadd.f32 %v1025, %v1059
          %v1065 = vadd.f32 %v1026, %v1059
          %v1066 = vadd.f32 %v1027, %v1059
          %v1067 = vadd.f32 %v1028, %v1059
          %v1068 = vadd.f32 %v1029, %v1059
          %v1069 = vadd.f32 %v1030, %v1059
          %v1070 = vadd.f32 %v1031, %v1059
          %v1071 = vadd.f32 %v1032, %v1059
          %v1072 = vadd.f32 %v1033, %v1059
          %v1073 = vadd.f32 %v1034, %v1059
          %v1074 = vadd.f32 %v1035, %v1059
          %v1075 = vadd.f32 %v1036, %v1059
          %v1076 = vadd.f32 %v1037, %v1059
          %v1077 = vadd.f32 %v1038, %v1059
          %v1078 = vadd.f32 %v1039, %v1059
          %v1079 = vadd.f32 %v1040, %v1059
          %v1080 = vadd.f32 %v1041, %v1059
          %v1081 = vadd.f32 %v1042, %v1059
          %v1082 = vadd.f32 %v1043, %v1059
          %v1083 = vadd.f32 %v1044, %v1059
          %v1084 = vadd.f32 %v1045, %v1059
          %v1085 = vadd.f32 %v1046, %v1059
          %v1086 = vadd.f32 %v1047, %v1059
          %v1087 = vadd.f32 %v1048, %v1059
          %v1088 = vadd.f32 %v1049, %v1059
          %v1089 = vadd.f32 %v1050, %v1059
          %v1090 = vadd.f32 %v1051, %v1059
          %v1091 = vadd.f32 %v1052, %v1059
          %v1092 = vadd.f32 %v1053, %v1059
          %v1093 = vmax.f32 %v1061, 0.0
          %v1094 = vmax.f32 %v1062, 0.0
          %v1095 = vmax.f32 %v1063, 0.0
          %v1096 = vmax.f32 %v1064, 0.0
          %v1097 = vmax.f32 %v1065, 0.0
          %v1098 = vmax.f32 %v1066, 0.0
          %v1099 = vmax.f32 %v1067, 0.0
          %v1100 = vmax.f32 %v1068, 0.0
          %v1101 = vmax.f32 %v1069, 0.0
          %v1102 = vmax.f32 %v1070, 0.0
          %v1103 = vmax.f32 %v1071, 0.0
          %v1104 = vmax.f32 %v1072, 0.0
          %v1105 = vmax.f32 %v1073, 0.0
          %v1106 = vmax.f32 %v1074, 0.0
          %v1107 = vmax.f32 %v1075, 0.0
          %v1108 = vmax.f32 %v1076, 0.0
          %v1109 = vmax.f32 %v1077, 0.0
          %v1110 = vmax.f32 %v1078, 0.0
          %v1111 = vmax.f32 %v1079, 0.0
          %v1112 = vmax.f32 %v1080, 0.0
          %v1113 = vmax.f32 %v1081, 0.0
          %v1114 = vmax.f32 %v1082, 0.0
          %v1115 = vmax.f32 %v1083, 0.0
          %v1116 = vmax.f32 %v1084, 0.0
          %v1117 = vmax.f32 %v1085, 0.0
          %v1118 = vmax.f32 %v1086, 0.0
          %v1119 = vmax.f32 %v1087, 0.0
          %v1120 = vmax.f32 %v1088, 0.0
          %v1121 = vmax.f32 %v1089, 0.0
          %v1122 = vmax.f32 %v1090, 0.0
          %v1123 = vmax.f32 %v1091, 0.0
          %v1124 = vmax.f32 %v1092, 0.0
          %v1125 = vld [vmem:[%s391] sm:$0xff]
          %v1126 = vld [vmem:[%s391 + $0x8] sm:$0xff]
          %v1127 = vld [vmem:[%s391 + $0x10] sm:$0xff]
          %v1128 = vld [vmem:[%s391 + $0x18] sm:$0xff]
          %v1129 = vld [vmem:[%s391 + $0x20] sm:$0xff]
          %v1130 = vld [vmem:[%s391 + $0x28] sm:$0xff]
          %v1131 = vld [vmem:[%s391 + $0x30] sm:$0xff]
          %v1132 = vld [vmem:[%s391 + $0x38] sm:$0xff]
          %v1133 = vld [vmem:[%s391 + $0x40] sm:$0xff]
          %v1134 = vld [vmem:[%s391 + $0x48] sm:$0xff]
          %v1135 = vld [vmem:[%s391 + $0x50] sm:$0xff]
          %v1136 = vld [vmem:[%s391 + $0x58] sm:$0xff]
          %v1137 = vld [vmem:[%s391 + $0x60] sm:$0xff]
          %v1138 = vld [vmem:[%s391 + $0x68] sm:$0xff]
          %v1139 = vld [vmem:[%s391 + $0x70] sm:$0xff]
          %v1140 = vld [vmem:[%s391 + $0x78] sm:$0xff]
          %v1141 = vld [vmem:[%s391 + $0x80] sm:$0xff]
          %v1142 = vld [vmem:[%s391 + $0x88] sm:$0xff]
          %v1143 = vld [vmem:[%s391 + $0x90] sm:$0xff]
          %v1144 = vld [vmem:[%s391 + $0x98] sm:$0xff]
          %v1145 = vld [vmem:[%s391 + $0xa0] sm:$0xff]
          %v1146 = vld [vmem:[%s391 + $0xa8] sm:$0xff]
          %v1147 = vld [vmem:[%s391 + $0xb0] sm:$0xff]
          %v1148 = vld [vmem:[%s391 + $0xb8] sm:$0xff]
          %v1149 = vld [vmem:[%s391 + $0xc0] sm:$0xff]
          %v1150 = vld [vmem:[%s391 + $0xc8] sm:$0xff]
          %v1151 = vld [vmem:[%s391 + $0xd0] sm:$0xff]
          %v1152 = vld [vmem:[%s391 + $0xd8] sm:$0xff]
          %v1153 = vld [vmem:[%s391 + $0xe0] sm:$0xff]
          %v1154 = vld [vmem:[%s391 + $0xe8] sm:$0xff]
          %v1155 = vld [vmem:[%s391 + $0xf0] sm:$0xff]
          %v1156 = vld [vmem:[%s391 + $0xf8] sm:$0xff]
          %v1157 = vadd.f32 %v1093, %v1125
          %v1158 = vadd.f32 %v1094, %v1126
          %v1159 = vadd.f32 %v1095, %v1127
          %v1160 = vadd.f32 %v1096, %v1128
          %v1161 = vadd.f32 %v1097, %v1129
          %v1162 = vadd.f32 %v1098, %v1130
          %v1163 = vadd.f32 %v1099, %v1131
          %v1164 = vadd.f32 %v1100, %v1132
          %v1165 = vadd.f32 %v1101, %v1133
          %v1166 = vadd.f32 %v1102, %v1134
          %v1167 = vadd.f32 %v1103, %v1135
          %v1168 = vadd.f32 %v1104, %v1136
          %v1169 = vadd.f32 %v1105, %v1137
          %v1170 = vadd.f32 %v1106, %v1138
          %v1171 = vadd.f32 %v1107, %v1139
          %v1172 = vadd.f32 %v1108, %v1140
          %v1173 = vadd.f32 %v1109, %v1141
          %v1174 = vadd.f32 %v1110, %v1142
          %v1175 = vadd.f32 %v1111, %v1143
          %v1176 = vadd.f32 %v1112, %v1144
          %v1177 = vadd.f32 %v1113, %v1145
          %v1178 = vadd.f32 %v1114, %v1146
          %v1179 = vadd.f32 %v1115, %v1147
          %v1180 = vadd.f32 %v1116, %v1148
          %v1181 = vadd.f32 %v1117, %v1149
          %v1182 = vadd.f32 %v1118, %v1150
          %v1183 = vadd.f32 %v1119, %v1151
          %v1184 = vadd.f32 %v1120, %v1152
          %v1185 = vadd.f32 %v1121, %v1153
          %v1186 = vadd.f32 %v1122, %v1154
          %v1187 = vadd.f32 %v1123, %v1155
          %v1188 = vadd.f32 %v1124, %v1156
          %1189 = vst [vmem:[%s397] sm:$0xff] %v1157
          %1190 = vst [vmem:[%s397 + $0x8] sm:$0xff] %v1158
          %1191 = vst [vmem:[%s397 + $0x10] sm:$0xff] %v1159
          %1192 = vst [vmem:[%s397 + $0x18] sm:$0xff] %v1160
          %1193 = vst [vmem:[%s397 + $0x20] sm:$0xff] %v1161
          %1194 = vst [vmem:[%s397 + $0x28] sm:$0xff] %v1162
          %1195 = vst [vmem:[%s397 + $0x30] sm:$0xff] %v1163
          %1196 = vst [vmem:[%s397 + $0x38] sm:$0xff] %v1164
          %1197 = vst [vmem:[%s397 + $0x40] sm:$0xff] %v1165
          %1198 = vst [vmem:[%s397 + $0x48] sm:$0xff] %v1166
          %1199 = vst [vmem:[%s397 + $0x50] sm:$0xff] %v1167
          %1200 = vst [vmem:[%s397 + $0x58] sm:$0xff] %v1168
          %1201 = vst [vmem:[%s397 + $0x60] sm:$0xff] %v1169
          %1202 = vst [vmem:[%s397 + $0x68] sm:$0xff] %v1170
          %1203 = vst [vmem:[%s397 + $0x70] sm:$0xff] %v1171
          %1204 = vst [vmem:[%s397 + $0x78] sm:$0xff] %v1172
          %1205 = vst [vmem:[%s397 + $0x80] sm:$0xff] %v1173
          %1206 = vst [vmem:[%s397 + $0x88] sm:$0xff] %v1174
          %1207 = vst [vmem:[%s397 + $0x90] sm:$0xff] %v1175
          %1208 = vst [vmem:[%s397 + $0x98] sm:$0xff] %v1176
          %1209 = vst [vmem:[%s397 + $0xa0] sm:$0xff] %v1177
          %1210 = vst [vmem:[%s397 + $0xa8] sm:$0xff] %v1178
          %1211 = vst [vmem:[%s397 + $0xb0] sm:$0xff] %v1179
          %1212 = vst [vmem:[%s397 + $0xb8] sm:$0xff] %v1180
          %1213 = vst [vmem:[%s397 + $0xc0] sm:$0xff] %v1181
          %1214 = vst [vmem:[%s397 + $0xc8] sm:$0xff] %v1182
          %1215 = vst [vmem:[%s397 + $0xd0] sm:$0xff] %v1183
          %1216 = vst [vmem:[%s397 + $0xd8] sm:$0xff] %v1184
          %1217 = vst [vmem:[%s397 + $0xe0] sm:$0xff] %v1185
          %1218 = vst [vmem:[%s397 + $0xe8] sm:$0xff] %v1186
          %1219 = vst [vmem:[%s397 + $0xf0] sm:$0xff] %v1187
          %1220 = vst [vmem:[%s397 + $0xf8] sm:$0xff] %v1188
        $region82: #{gcn_conv_layer.3} parent=69 // pred_fallthru
          _
        %s1221 = smul.u32 32, %s19
        %p1222 = scmp.lt.s32.totalorder %s1221, 63
        %s1223 = scalar_select %p1222, %s1221, 63
        %s1224 = smul.addr %s1223, 8
        %s1225 = scalar_lea.vmem %s4, %s1224
        // Predicated region
        $region83: #{gcn_conv_layer.3} parent=69 // pred_check
          %p1226 = pneg %p141
        $region84: #{gcn_conv_layer.3} parent=69 // pred_check_branch
          %1228 = sbr.rel (%p1226) target = $region86
        $region85: #{gcn_conv_layer.3} parent=69 // pred_region
          %s1229 = smul.u32 32, %s19
        $region86: #{gcn_conv_layer.3} parent=69 // pred_fallthru
          _
      $region70: #{gcn_conv_layer.3} parent=5 // pred_fallthru
        _
      %p1230 = scmp.le.s32.totalorder 2, %s10
      // Predicated region
      $region87: #{gcn_conv_layer.3} parent=5 // pred_check
        %p1231 = pneg %p1230
      $region88: #{gcn_conv_layer.3} parent=5 // pred_check_branch
        %1233 = sbr.rel (%p1231) target = $region90
      $region89: #{gcn_conv_layer.3} parent=5 // pred_region
        %s1234 = ssub.s32 %s10, 2
        // Predicated region
        $region91: #{gcn_conv_layer.3} parent=89 // pred_check
          %p1235 = pneg %p147
        $region92: #{gcn_conv_layer.3} parent=89 // pred_check_branch
          %1237 = sbr.rel (%p1235) target = $region94
        $region93: #{gcn_conv_layer.3} parent=89 // pred_region
          %s1238 = smul.u32 32, %s21
          %p1239 = scmp.lt.s32.totalorder %s1238, 63
          %s1240 = scalar_select %p1239, %s1238, 63
          %s1241 = smul.addr %s1240, 8
          %s1242 = scalar_lea.vmem %s4, %s1241
        $region94: #{gcn_conv_layer.3} parent=89 // pred_fallthru
          _
      $region90: #{gcn_conv_layer.3} parent=5 // pred_fallthru
        _
    $region6: #{gcn_conv_layer.3} parent=1 // loop_footer
      %s14 = sadd.s32 1, %s10
    $region7: #{gcn_conv_layer.3} parent=1 // loop_footer_branch
      %9 = sbr.rel target = $region3
    $region8: #{gcn_conv_layer.3} parent=1 // loop_exit
      _

</llo_original>
